<compile_context>
chip_gen: v6e
topology: v6e:2x2x1
jax: 0.10.0
libtpu: 0.0.40
codegen_flags: <defaults>
</compile_context>

<pallas_src>
import jax
import jax.numpy as jnp
from jax.experimental import pallas as pl
from jax.experimental.pallas import tpu as pltpu

BN_EPS = 1e-5

# Logical (PyTorch) dims and lane-padded dims.
D_IN, H1, H2, D_OUT = 28 * 28, 500, 350, 10
H1_P, H2_P, D_OUT_P = 512, 384, 128


def _make_kernel(inv_b):
    """inv_b = 1 / (true batch size); closed over as a compile-time constant."""

    def _mlp_kernel(x_ref, mask_ref,
                    w1_ref, g1_ref, be1_ref,
                    w2_ref, g2_ref, be2_ref,
                    w3_ref, b3_ref,
                    o_ref):
        mask = mask_ref[...]  # (1, Bp) f32: 1.0 for real rows, 0.0 for batch padding.

        def bn_relu(h, g, beta):
            # Masked batch mean/variance via MXU row-vector matmuls (real rows only);
            # keeps the VPU/XLU slots free and makes batch padding statistics-neutral.
            mu = jnp.dot(mask, h, preferred_element_type=jnp.float32) * inv_b
            hc = h - mu
            var = jnp.dot(mask, hc * hc, preferred_element_type=jnp.float32) * inv_b
            scale = g * jax.lax.rsqrt(var + BN_EPS)
            return jnp.maximum(hc * scale + beta, 0.0)

        # ---- fc1 (bf16 MXU; bias dropped: cancelled by BN mean) + BN1 + ReLU ----
        h = jnp.dot(x_ref[...].astype(jnp.bfloat16), w1_ref[...],
                    preferred_element_type=jnp.float32)
        h = bn_relu(h, g1_ref[...], be1_ref[...])

        # ---- fc2 (bf16 MXU; bias dropped) + BN2 + ReLU ----
        h = jnp.dot(h.astype(jnp.bfloat16), w2_ref[...],
                    preferred_element_type=jnp.float32)
        h = bn_relu(h, g2_ref[...], be2_ref[...])

        # ---- fc3 (bf16 MXU) -> lane-dense (Bp, 128) logits; cols >= 10 are exact 0 ----
        o_ref[...] = (jnp.dot(h.astype(jnp.bfloat16), w3_ref[...],
                              preferred_element_type=jnp.float32)
                      + b3_ref[...]).astype(o_ref.dtype)

    return _mlp_kernel


def pack_params(params):
    """Pad logical f32 params to lane multiples; weights -> bf16, vectors stay f32.

    b1/b2 are intentionally dropped (a pre-BN per-channel constant is cancelled by
    the mean subtraction).  Padded cols of weights / gamma / beta are zero, which keeps
    padded channels exactly zero through BN + ReLU.
    """
    (w1, _b1, g1, be1, w2, _b2, g2, be2, w3, b3) = params

    def pad_w(w, rp, cp):
        return jnp.pad(w, ((0, rp - w.shape[0]), (0, cp - w.shape[1]))).astype(jnp.bfloat16)

    def pad_v(v, cp):  # v is (1, n) f32
        return jnp.pad(v, ((0, 0), (0, cp - v.shape[1]))).astype(jnp.float32)

    return (pad_w(w1, D_IN, H1_P),              # no row padding: 784 is a multiple of 16
            pad_v(g1, H1_P), pad_v(be1, H1_P),
            pad_w(w2, H1_P, H2_P), pad_v(g2, H2_P), pad_v(be2, H2_P),
            pad_w(w3, H2_P, D_OUT_P), pad_v(b3, D_OUT_P))


def _vmem_capacity_bytes():
    try:
        return int(pltpu.get_tpu_info().vmem_capacity_bytes)
    except Exception:
        return 64 * 1024 * 1024   # conservative fallback (v7x per-core VMEM)


def mlpnet_forward(x, params):
    """x: (B, 1, 28, 28) float32 (NCHW).  Returns (B, 10) f32 logits."""
    B = x.shape[0]
    x2d = x.reshape(B, D_IN).astype(jnp.float32)   # reshape is free; no pad, no bf16 copy

    # Sublane-align the batch; padded rows are masked out of BN statistics and sliced
    # off the output, so results are unchanged.  For already-aligned B this is a no-op.
    Bp = -(-B // 8) * 8
    if Bp != B:
        x2d = jnp.pad(x2d, ((0, Bp - B), (0, 0)))
    row_mask = (jnp.arange(Bp) < B).astype(jnp.float32).reshape(1, Bp)

    packed = pack_params(params)
    args = (x2d, row_mask) + packed

    # --- VMEM budgeting (single block, no pipelining), generation aware ---
    weight_bytes = 2 * (D_IN * H1_P + H1_P * H2_P + H2_P * D_OUT_P)
    io_bytes = 4 * Bp * D_IN + 4 * Bp * D_OUT_P
    act_bytes = 4 * Bp * (H1_P + H2_P) * 3 + 2 * Bp * (D_IN + H1_P + H2_P)  # f32 temps + bf16 casts
    est_bytes = weight_bytes + io_bytes + act_bytes + (2 << 20)
    cap = _vmem_capacity_bytes()
    vmem_limit = int(min(cap - (8 << 20), max(32 << 20, 2 * est_bytes)))
    if est_bytes > vmem_limit:
        # TODO(synk): switch to the batch-tiled / feature-split variant for large B.
        raise NotImplementedError(
            f"batch {B} too large for single-block MLPNet kernel "
            f"(needs ~{est_bytes >> 20} MiB VMEM, limit {vmem_limit >> 20} MiB)")

    flops = 2 * Bp * (D_IN * H1_P + H1_P * H2_P + H2_P * D_OUT_P) + 8 * Bp * (H1_P + H2_P)
    cost = pl.CostEstimate(
        flops=flops,
        transcendentals=H1_P + H2_P,            # rsqrt per BN channel
        bytes_accessed=weight_bytes + io_bytes + 4 * 4 * (H1_P + H2_P),
    )

    vmem_spec = pl.BlockSpec(memory_space=pltpu.MemorySpace.VMEM)
    out_padded = pl.pallas_call(
        _make_kernel(1.0 / B),
        out_shape=jax.ShapeDtypeStruct((Bp, D_OUT_P), jnp.float32),
        in_specs=[vmem_spec] * len(args),
        out_specs=vmem_spec,
        compiler_params=pltpu.CompilerParams(vmem_limit_bytes=vmem_limit),
        cost_estimate=cost,
    )(*args)

    return out_padded[:B, :D_OUT]


def init_params(key, nhiddens=(H1, H2)):
    """Logical f32 params matching nn.Linear defaults (U(-1/sqrt(fan_in), +))."""
    d_in, h1, h2, d_out = D_IN, nhiddens[0], nhiddens[1], D_OUT
    ks = jax.random.split(key, 6)

    def linear(kw, kb, fan_in, fan_out):
        bound = 1.0 / (fan_in ** 0.5)
        # weight pre-transposed as (in, out); bias as (1, out).
        w = jax.random.uniform(kw, (fan_in, fan_out), jnp.float32, -bound, bound)
        b = jax.random.uniform(kb, (1, fan_out), jnp.float32, -bound, bound)
        return w, b

    w1, b1 = linear(ks[0], ks[1], d_in, h1)
    w2, b2 = linear(ks[2], ks[3], h1, h2)
    w3, b3 = linear(ks[4], ks[5], h2, d_out)

    # BatchNorm1d affine params: gamma=1, beta=0 (default init).
    g1, be1 = jnp.ones((1, h1), jnp.float32), jnp.zeros((1, h1), jnp.float32)
    g2, be2 = jnp.ones((1, h2), jnp.float32), jnp.zeros((1, h2), jnp.float32)

    return (w1, b1, g1, be1, w2, b2, g2, be2, w3, b3)


def _reference(x, params):
    """Pure-JAX reference with PyTorch semantics (biases included; BN cancels b1/b2)."""
    (w1, b1, g1, be1, w2, b2, g2, be2, w3, b3) = params
    h = x.reshape(x.shape[0], -1).astype(jnp.float32)

    def dot_bf16(a, w):
        return jnp.dot(a.astype(jnp.bfloat16), w.astype(jnp.bfloat16),
                       preferred_element_type=jnp.float32)

    def bn(h, g, beta):
        mu = jnp.mean(h, axis=0, keepdims=True)
        hc = h - mu
        var = jnp.mean(hc * hc, axis=0, keepdims=True)
        return hc * (g * jax.lax.rsqrt(var + BN_EPS)) + beta

    h = jnp.maximum(bn(dot_bf16(h, w1) + b1, g1, be1), 0.0)
    h = jnp.maximum(bn(dot_bf16(h, w2) + b2, g2, be2), 0.0)
    return dot_bf16(h, w3) + b3


if __name__ == "__main__":
    key = jax.random.PRNGKey(0)
    k_x, k_p = jax.random.split(key)

    B = 2
    x = jax.random.normal(k_x, (B, 1, 28, 28), jnp.float32)   # NCHW input
    params = init_params(k_p)

    out = mlpnet_forward(x, params)
    out = jax.block_until_ready(out)

    ref = _reference(x, params)
    assert out.shape == (B, 10)
    assert bool(jnp.allclose(out, ref, atol=1e-2, rtol=1e-2)), "mismatch vs reference"

    print("KERNEL_OK")
</pallas_src>

<mosaic_0001>
module attributes {stable_mosaic.version = 11 : i64} {
  func.func @_mlp_kernel(%arg0: memref<8x784xf32, #tpu.memory_space<vmem>>, %arg1: memref<1x8xf32, #tpu.memory_space<vmem>>, %arg2: memref<784x512xbf16, #tpu.memory_space<vmem>>, %arg3: memref<1x512xf32, #tpu.memory_space<vmem>>, %arg4: memref<1x512xf32, #tpu.memory_space<vmem>>, %arg5: memref<512x384xbf16, #tpu.memory_space<vmem>>, %arg6: memref<1x384xf32, #tpu.memory_space<vmem>>, %arg7: memref<1x384xf32, #tpu.memory_space<vmem>>, %arg8: memref<384x128xbf16, #tpu.memory_space<vmem>>, %arg9: memref<1x128xf32, #tpu.memory_space<vmem>>, %arg10: memref<8x128xf32, #tpu.memory_space<vmem>>) attributes {dimension_semantics = [], scalar_prefetch = 0 : i64, scratch_operands = 0 : i64, tpu.core_type = #tpu.core_type<tc>} {
    %c0 = arith.constant 0 : index
    %c0_0 = arith.constant 0 : index
    %0 = vector.load %arg1[%c0, %c0_0] : memref<1x8xf32, #tpu.memory_space<vmem>>, vector<1x8xf32>
    %c0_1 = arith.constant 0 : index
    %c0_2 = arith.constant 0 : index
    %1 = vector.load %arg0[%c0_1, %c0_2] : memref<8x784xf32, #tpu.memory_space<vmem>>, vector<8x784xf32>
    %2 = arith.truncf %1 : vector<8x784xf32> to vector<8x784xbf16>
    %c0_3 = arith.constant 0 : index
    %c0_4 = arith.constant 0 : index
    %3 = vector.load %arg2[%c0_3, %c0_4] : memref<784x512xbf16, #tpu.memory_space<vmem>>, vector<784x512xbf16>
    %cst = arith.constant dense<0.000000e+00> : vector<8x512xf32>
    %4 = tpu.matmul %2, %3, %cst {dimension_numbers = #tpu.dot_dimension_numbers<[1], [0], [0], [1], [0, 0, 1, 1], [], []>} : vector<8x784xbf16>, vector<784x512xbf16>, vector<8x512xf32> -> vector<8x512xf32>
    %c0_5 = arith.constant 0 : index
    %c0_6 = arith.constant 0 : index
    %5 = vector.load %arg3[%c0_5, %c0_6] : memref<1x512xf32, #tpu.memory_space<vmem>>, vector<1x512xf32>
    %c0_7 = arith.constant 0 : index
    %c0_8 = arith.constant 0 : index
    %6 = vector.load %arg4[%c0_7, %c0_8] : memref<1x512xf32, #tpu.memory_space<vmem>>, vector<1x512xf32>
    %cst_9 = arith.constant dense<0.000000e+00> : vector<1x512xf32>
    %7 = tpu.matmul %0, %4, %cst_9 {dimension_numbers = #tpu.dot_dimension_numbers<[1], [0], [0], [1], [0, 0, 1, 1], [], []>} : vector<1x8xf32>, vector<8x512xf32>, vector<1x512xf32> -> vector<1x512xf32>
    %cst_10 = arith.constant 5.000000e-01 : f32
    %8 = vector.broadcast %cst_10 : f32 to vector<1x512xf32>
    %9 = arith.mulf %7, %8 : vector<1x512xf32>
    %10 = vector.broadcast %9 : vector<1x512xf32> to vector<8x512xf32>
    %11 = arith.subf %4, %10 : vector<8x512xf32>
    %12 = arith.mulf %11, %11 : vector<8x512xf32>
    %cst_11 = arith.constant dense<0.000000e+00> : vector<1x512xf32>
    %13 = tpu.matmul %0, %12, %cst_11 {dimension_numbers = #tpu.dot_dimension_numbers<[1], [0], [0], [1], [0, 0, 1, 1], [], []>} : vector<1x8xf32>, vector<8x512xf32>, vector<1x512xf32> -> vector<1x512xf32>
    %cst_12 = arith.constant 5.000000e-01 : f32
    %14 = vector.broadcast %cst_12 : f32 to vector<1x512xf32>
    %15 = arith.mulf %13, %14 : vector<1x512xf32>
    %cst_13 = arith.constant 9.99999974E-6 : f32
    %16 = vector.broadcast %cst_13 : f32 to vector<1x512xf32>
    %17 = arith.addf %15, %16 : vector<1x512xf32>
    %18 = math.rsqrt %17 : vector<1x512xf32>
    %19 = arith.mulf %5, %18 : vector<1x512xf32>
    %20 = vector.broadcast %19 : vector<1x512xf32> to vector<8x512xf32>
    %21 = arith.mulf %11, %20 : vector<8x512xf32>
    %22 = vector.broadcast %6 : vector<1x512xf32> to vector<8x512xf32>
    %23 = arith.addf %21, %22 : vector<8x512xf32>
    %cst_14 = arith.constant 0.000000e+00 : f32
    %24 = vector.broadcast %cst_14 : f32 to vector<8x512xf32>
    %25 = arith.maximumf %23, %24 : vector<8x512xf32>
    %26 = arith.truncf %25 : vector<8x512xf32> to vector<8x512xbf16>
    %c0_15 = arith.constant 0 : index
    %c0_16 = arith.constant 0 : index
    %27 = vector.load %arg5[%c0_15, %c0_16] : memref<512x384xbf16, #tpu.memory_space<vmem>>, vector<512x384xbf16>
    %cst_17 = arith.constant dense<0.000000e+00> : vector<8x384xf32>
    %28 = tpu.matmul %26, %27, %cst_17 {dimension_numbers = #tpu.dot_dimension_numbers<[1], [0], [0], [1], [0, 0, 1, 1], [], []>} : vector<8x512xbf16>, vector<512x384xbf16>, vector<8x384xf32> -> vector<8x384xf32>
    %c0_18 = arith.constant 0 : index
    %c0_19 = arith.constant 0 : index
    %29 = vector.load %arg6[%c0_18, %c0_19] : memref<1x384xf32, #tpu.memory_space<vmem>>, vector<1x384xf32>
    %c0_20 = arith.constant 0 : index
    %c0_21 = arith.constant 0 : index
    %30 = vector.load %arg7[%c0_20, %c0_21] : memref<1x384xf32, #tpu.memory_space<vmem>>, vector<1x384xf32>
    %cst_22 = arith.constant dense<0.000000e+00> : vector<1x384xf32>
    %31 = tpu.matmul %0, %28, %cst_22 {dimension_numbers = #tpu.dot_dimension_numbers<[1], [0], [0], [1], [0, 0, 1, 1], [], []>} : vector<1x8xf32>, vector<8x384xf32>, vector<1x384xf32> -> vector<1x384xf32>
    %cst_23 = arith.constant 5.000000e-01 : f32
    %32 = vector.broadcast %cst_23 : f32 to vector<1x384xf32>
    %33 = arith.mulf %31, %32 : vector<1x384xf32>
    %34 = vector.broadcast %33 : vector<1x384xf32> to vector<8x384xf32>
    %35 = arith.subf %28, %34 : vector<8x384xf32>
    %36 = arith.mulf %35, %35 : vector<8x384xf32>
    %cst_24 = arith.constant dense<0.000000e+00> : vector<1x384xf32>
    %37 = tpu.matmul %0, %36, %cst_24 {dimension_numbers = #tpu.dot_dimension_numbers<[1], [0], [0], [1], [0, 0, 1, 1], [], []>} : vector<1x8xf32>, vector<8x384xf32>, vector<1x384xf32> -> vector<1x384xf32>
    %cst_25 = arith.constant 5.000000e-01 : f32
    %38 = vector.broadcast %cst_25 : f32 to vector<1x384xf32>
    %39 = arith.mulf %37, %38 : vector<1x384xf32>
    %cst_26 = arith.constant 9.99999974E-6 : f32
    %40 = vector.broadcast %cst_26 : f32 to vector<1x384xf32>
    %41 = arith.addf %39, %40 : vector<1x384xf32>
    %42 = math.rsqrt %41 : vector<1x384xf32>
    %43 = arith.mulf %29, %42 : vector<1x384xf32>
    %44 = vector.broadcast %43 : vector<1x384xf32> to vector<8x384xf32>
    %45 = arith.mulf %35, %44 : vector<8x384xf32>
    %46 = vector.broadcast %30 : vector<1x384xf32> to vector<8x384xf32>
    %47 = arith.addf %45, %46 : vector<8x384xf32>
    %cst_27 = arith.constant 0.000000e+00 : f32
    %48 = vector.broadcast %cst_27 : f32 to vector<8x384xf32>
    %49 = arith.maximumf %47, %48 : vector<8x384xf32>
    %50 = arith.truncf %49 : vector<8x384xf32> to vector<8x384xbf16>
    %c0_28 = arith.constant 0 : index
    %c0_29 = arith.constant 0 : index
    %51 = vector.load %arg8[%c0_28, %c0_29] : memref<384x128xbf16, #tpu.memory_space<vmem>>, vector<384x128xbf16>
    %cst_30 = arith.constant dense<0.000000e+00> : vector<8x128xf32>
    %52 = tpu.matmul %50, %51, %cst_30 {dimension_numbers = #tpu.dot_dimension_numbers<[1], [0], [0], [1], [0, 0, 1, 1], [], []>} : vector<8x384xbf16>, vector<384x128xbf16>, vector<8x128xf32> -> vector<8x128xf32>
    %c0_31 = arith.constant 0 : index
    %c0_32 = arith.constant 0 : index
    %53 = vector.load %arg9[%c0_31, %c0_32] : memref<1x128xf32, #tpu.memory_space<vmem>>, vector<1x128xf32>
    %54 = vector.broadcast %53 : vector<1x128xf32> to vector<8x128xf32>
    %55 = arith.addf %52, %54 : vector<8x128xf32>
    %c0_33 = arith.constant 0 : index
    %c0_34 = arith.constant 0 : index
    %56 = vector.load %arg10[%c0_33, %c0_34] : memref<8x128xf32, #tpu.memory_space<vmem>>, vector<8x128xf32>
    tpu.vector_store %arg10[%c0_33, %c0_34], %55 {strides = array<i32>} : memref<8x128xf32, #tpu.memory_space<vmem>>, vector<8x128xf32>,
    return
  }
}

</mosaic_0001>

<llo_original>
// kernel: tpu_custom_call.1
$region0: #{tpu_custom_call.1}
  #allocation0 [shape = 'u32[]', space=smem, size = 0x4, offset = 0x4, fixed_abs, tag = 'smem constant byte address 0x4 - core index']
  #allocation1 [shape = 'u32[144,128]{1,0:T(1,128)}', space=vmem, size = 0x12000, scoped, tag = 'internal scratch']
  %s0 = inlined_call_operand.hbm [shape: f32[8,784], index: 0, kind: input, shape index: {}]
  %s1 = inlined_call_operand.hbm [shape: f32[1,8], index: 1, kind: input, shape index: {}]
  %s2 = inlined_call_operand.hbm [shape: bf16[784,512], index: 2, kind: input, shape index: {}]
  %s3 = inlined_call_operand.vmem [shape: f32[1,512], index: 3, kind: input, shape index: {}]
  %s4 = inlined_call_operand.hbm [shape: f32[1,512], index: 4, kind: input, shape index: {}]
  %s5 = inlined_call_operand.hbm [shape: bf16[512,384], index: 5, kind: input, shape index: {}]
  %s6 = inlined_call_operand.vmem [shape: f32[1,384], index: 6, kind: input, shape index: {}]
  %s7 = inlined_call_operand.vmem [shape: f32[1,384], index: 7, kind: input, shape index: {}]
  %s8 = inlined_call_operand.hbm [shape: bf16[384,128], index: 8, kind: input, shape index: {}]
  %s9 = inlined_call_operand.vmem [shape: f32[1,128], index: 9, kind: input, shape index: {}]
  %s10 = inlined_call_operand.hbm [shape: f32[8,128], index: 10, kind: output, shape index: {}]
  %s11 = sld [smem:[#allocation0]]
  $region74: #{tpu_custom_call.1} parent=0
    _
  %s13 = ssub.s32 1, %s11
  %s14 = scalar_select 0, %s13, %s11
  $region1: #{tpu_custom_call.1} parent=0
    #allocation2 [shape = 'u8[28672]{0}', space=vmem, size = 0x7000, scoped, tag = 'input window, operand 0, single buffered']
    #allocation3 [shape = 's32[1]{0}', space=sflag, size = 0x4, scoped, tag = 'scoped memory for tpu_custom_call.1']
    #allocation4 [shape = 's32[1]{0}', space=sflag, size = 0x4, scoped, tag = 'scoped memory for tpu_custom_call.1']
    #allocation5 [shape = 'u8[512]{0}', space=vmem, size = 0x400, scoped, tag = 'input window, operand 1, single buffered']
    #allocation6 [shape = 's32[1]{0}', space=sflag, size = 0x4, scoped, tag = 'scoped memory for tpu_custom_call.1']
    #allocation7 [shape = 'u8[802816]{0}', space=vmem, size = 0xc4000, scoped, tag = 'input window, operand 2, single buffered']
    #allocation8 [shape = 'u8[2048]{0}', space=vmem, size = 0x800, scoped, tag = 'input window, operand 4, single buffered']
    #allocation9 [shape = 's32[1]{0}', space=sflag, size = 0x4, scoped, tag = 'scoped memory for tpu_custom_call.1']
    #allocation10 [shape = 'u8[393216]{0}', space=vmem, size = 0x60000, scoped, tag = 'input window, operand 5, single buffered']
    #allocation11 [shape = 'u8[98304]{0}', space=vmem, size = 0x18000, scoped, tag = 'input window, operand 8, single buffered']
    #allocation12 [shape = 's32[1]{0}', space=sflag, size = 0x4, scoped, tag = 'scoped memory for tpu_custom_call.1']
    #allocation13 [shape = 'u8[4096]{0}', space=vmem, size = 0x1000, scoped, tag = 'output window, operand 0, single buffered']
    %15 = vsyncpa [#allocation3], 0
    %16 = vsyncpa [#allocation6], 0
    %17 = vsyncpa [#allocation9], 0
    %18 = vsyncpa [#allocation12], 0
    %19 = vsyncpa [#allocation4], 0
    // Predicated region
    $region2: #{tpu_custom_call.1} parent=1 // pred_check
      _
    $region3: #{tpu_custom_call.1} parent=1 // pred_check_branch
      %21 = sbr.rel (0) target = $region5
    $region4: #{tpu_custom_call.1} parent=1 // pred_region
      %s23 = ssub.s32 896, 896
      %24 = vsyncadd [#allocation3], %s23
      %s26 = sshll.u32 [#allocation2], 4
      %s27 = int_to_ptr.vmem [resolvable:$true] %s26
      %29 = dma.hbm_to_vmem [thread:$0]  %s0, 896, %s27, [#allocation3]
    $region5: #{tpu_custom_call.1} parent=1 // pred_fallthru
      _
    // Predicated region
    $region6: #{tpu_custom_call.1} parent=1 // pred_check
      _
    $region7: #{tpu_custom_call.1} parent=1 // pred_check_branch
      %31 = sbr.rel (0) target = $region9
    $region8: #{tpu_custom_call.1} parent=1 // pred_region
      %s33 = ssub.s32 16, 16
      %34 = vsyncadd [#allocation6], %s33
      %s36 = sshll.u32 [#allocation5], 4
      %s37 = int_to_ptr.vmem [resolvable:$true] %s36
      %39 = dma.hbm_to_vmem [thread:$0]  %s1, 16, %s37, [#allocation6]
    $region9: #{tpu_custom_call.1} parent=1 // pred_fallthru
      _
    // Predicated region
    $region10: #{tpu_custom_call.1} parent=1 // pred_check
      _
    $region11: #{tpu_custom_call.1} parent=1 // pred_check_branch
      %41 = sbr.rel (0) target = $region13
    $region12: #{tpu_custom_call.1} parent=1 // pred_region
      %s43 = ssub.s32 25088, 25088
      %44 = vsyncadd [#allocation6], %s43
      %s45 = sshll.u32 [#allocation7], 4
      %s46 = int_to_ptr.vmem [resolvable:$true] %s45
      %51 = dma.hbm_to_vmem [thread:$0]  %s2, 25088, %s46, [#allocation6], 256, 256, 16
    $region13: #{tpu_custom_call.1} parent=1 // pred_fallthru
      _
    // Predicated region
    $region14: #{tpu_custom_call.1} parent=1 // pred_check
      _
    $region15: #{tpu_custom_call.1} parent=1 // pred_check_branch
      %53 = sbr.rel (0) target = $region17
    $region16: #{tpu_custom_call.1} parent=1 // pred_region
      _
    $region17: #{tpu_custom_call.1} parent=1 // pred_fallthru
      _
    // Predicated region
    $region18: #{tpu_custom_call.1} parent=1 // pred_check
      _
    $region19: #{tpu_custom_call.1} parent=1 // pred_check_branch
      %55 = sbr.rel (0) target = $region21
    $region20: #{tpu_custom_call.1} parent=1 // pred_region
      %s57 = ssub.s32 64, 64
      %58 = vsyncadd [#allocation9], %s57
      %s60 = sshll.u32 [#allocation8], 4
      %s61 = int_to_ptr.vmem [resolvable:$true] %s60
      %63 = dma.hbm_to_vmem [thread:$0]  %s4, 64, %s61, [#allocation9]
    $region21: #{tpu_custom_call.1} parent=1 // pred_fallthru
      _
    // Predicated region
    $region22: #{tpu_custom_call.1} parent=1 // pred_check
      _
    $region23: #{tpu_custom_call.1} parent=1 // pred_check_branch
      %65 = sbr.rel (0) target = $region25
    $region24: #{tpu_custom_call.1} parent=1 // pred_region
      %s67 = ssub.s32 12288, 12288
      %68 = vsyncadd [#allocation9], %s67
      %s69 = sshll.u32 [#allocation10], 4
      %s70 = int_to_ptr.vmem [resolvable:$true] %s69
      %75 = dma.hbm_to_vmem [thread:$0]  %s5, 12288, %s70, [#allocation9], 192, 192, 12
    $region25: #{tpu_custom_call.1} parent=1 // pred_fallthru
      _
    // Predicated region
    $region26: #{tpu_custom_call.1} parent=1 // pred_check
      _
    $region27: #{tpu_custom_call.1} parent=1 // pred_check_branch
      %77 = sbr.rel (0) target = $region29
    $region28: #{tpu_custom_call.1} parent=1 // pred_region
      _
    $region29: #{tpu_custom_call.1} parent=1 // pred_fallthru
      _
    // Predicated region
    $region30: #{tpu_custom_call.1} parent=1 // pred_check
      _
    $region31: #{tpu_custom_call.1} parent=1 // pred_check_branch
      %79 = sbr.rel (0) target = $region33
    $region32: #{tpu_custom_call.1} parent=1 // pred_region
      _
    $region33: #{tpu_custom_call.1} parent=1 // pred_fallthru
      _
    // Predicated region
    $region34: #{tpu_custom_call.1} parent=1 // pred_check
      _
    $region35: #{tpu_custom_call.1} parent=1 // pred_check_branch
      %81 = sbr.rel (0) target = $region37
    $region36: #{tpu_custom_call.1} parent=1 // pred_region
      %s83 = ssub.s32 3072, 3072
      %84 = vsyncadd [#allocation12], %s83
      %s85 = sshll.u32 [#allocation11], 4
      %s86 = int_to_ptr.vmem [resolvable:$true] %s85
      %91 = dma.hbm_to_vmem [thread:$0]  %s8, 3072, %s86, [#allocation12], 64, 64, 4
    $region37: #{tpu_custom_call.1} parent=1 // pred_fallthru
      _
    // Predicated region
    $region38: #{tpu_custom_call.1} parent=1 // pred_check
      _
    $region39: #{tpu_custom_call.1} parent=1 // pred_check_branch
      %93 = sbr.rel (0) target = $region41
    $region40: #{tpu_custom_call.1} parent=1 // pred_region
      _
    $region41: #{tpu_custom_call.1} parent=1 // pred_fallthru
      _
    // Predicated region
    $region42: #{tpu_custom_call.1} parent=1 // pred_check
      _
    $region43: #{tpu_custom_call.1} parent=1 // pred_check_branch
      %95 = sbr.rel (0) target = $region45
    $region44: #{tpu_custom_call.1} parent=1 // pred_region
      %96 = dma.done [#allocation3], 896
    $region45: #{tpu_custom_call.1} parent=1 // pred_fallthru
      _
    // Predicated region
    $region46: #{tpu_custom_call.1} parent=1 // pred_check
      _
    $region47: #{tpu_custom_call.1} parent=1 // pred_check_branch
      %98 = sbr.rel (0) target = $region49
    $region48: #{tpu_custom_call.1} parent=1 // pred_region
      %99 = dma.done [#allocation6], 16
    $region49: #{tpu_custom_call.1} parent=1 // pred_fallthru
      _
    // Predicated region
    $region50: #{tpu_custom_call.1} parent=1 // pred_check
      _
    $region51: #{tpu_custom_call.1} parent=1 // pred_check_branch
      %101 = sbr.rel (0) target = $region53
    $region52: #{tpu_custom_call.1} parent=1 // pred_region
      %102 = dma.done [#allocation6], 25088
    $region53: #{tpu_custom_call.1} parent=1 // pred_fallthru
      _
    // Predicated region
    $region54: #{tpu_custom_call.1} parent=1 // pred_check
      _
    $region55: #{tpu_custom_call.1} parent=1 // pred_check_branch
      %104 = sbr.rel (0) target = $region57
    $region56: #{tpu_custom_call.1} parent=1 // pred_region
      %105 = dma.done [#allocation9], 64
    $region57: #{tpu_custom_call.1} parent=1 // pred_fallthru
      _
    // Predicated region
    $region58: #{tpu_custom_call.1} parent=1 // pred_check
      _
    $region59: #{tpu_custom_call.1} parent=1 // pred_check_branch
      %107 = sbr.rel (0) target = $region61
    $region60: #{tpu_custom_call.1} parent=1 // pred_region
      %108 = dma.done [#allocation9], 12288
    $region61: #{tpu_custom_call.1} parent=1 // pred_fallthru
      _
    // Predicated region
    $region62: #{tpu_custom_call.1} parent=1 // pred_check
      _
    $region63: #{tpu_custom_call.1} parent=1 // pred_check_branch
      %110 = sbr.rel (0) target = $region65
    $region64: #{tpu_custom_call.1} parent=1 // pred_region
      %111 = dma.done [#allocation12], 3072
    $region65: #{tpu_custom_call.1} parent=1 // pred_fallthru
      _
    %v113 = vld [vmem:[#allocation5] sm:$0x1]
    %v114 = vld [vmem:[#allocation2] sm:$0xff]
    %v115 = vld [vmem:[#allocation2 + $0x8] sm:$0xff]
    %v116 = vld [vmem:[#allocation2 + $0x10] sm:$0xff]
    %v117 = vld [vmem:[#allocation2 + $0x18] sm:$0xff]
    %v118 = vld [vmem:[#allocation2 + $0x20] sm:$0xff]
    %v119 = vld [vmem:[#allocation2 + $0x28] sm:$0xff]
    %v120 = vld [vmem:[#allocation2 + $0x30] sm:$0xff]
    %v121 = vpack.c.bf16 %v114, %v114
    %v122 = vpack.c.bf16 %v115, %v115
    %v123 = vpack.c.bf16 %v116, %v116
    %v124 = vpack.c.bf16 %v117, %v117
    %v125 = vpack.c.bf16 %v118, %v118
    %v126 = vpack.c.bf16 %v119, %v119
    %v127 = vpack.c.bf16 %v120, %v120
    %v128 = vld [vmem:[#allocation7] sm:$0xff]
    %v129 = vld [vmem:[#allocation7 + $0x8] sm:$0xff]
    %v130 = vld [vmem:[#allocation7 + $0x10] sm:$0xff]
    %v131 = vld [vmem:[#allocation7 + $0x18] sm:$0xff]
    %v132 = vld [vmem:[#allocation7 + $0x20] sm:$0xff]
    %v133 = vld [vmem:[#allocation7 + $0x28] sm:$0xff]
    %v134 = vld [vmem:[#allocation7 + $0x30] sm:$0xff]
    %v135 = vld [vmem:[#allocation7 + $0x38] sm:$0xff]
    %v136 = vld [vmem:[#allocation7 + $0x40] sm:$0xff]
    %v137 = vld [vmem:[#allocation7 + $0x48] sm:$0xff]
    %v138 = vld [vmem:[#allocation7 + $0x50] sm:$0xff]
    %v139 = vld [vmem:[#allocation7 + $0x58] sm:$0xff]
    %v140 = vld [vmem:[#allocation7 + $0x60] sm:$0xff]
    %v141 = vld [vmem:[#allocation7 + $0x68] sm:$0xff]
    %v142 = vld [vmem:[#allocation7 + $0x70] sm:$0xff]
    %v143 = vld [vmem:[#allocation7 + $0x78] sm:$0xff]
    %v144 = vld [vmem:[#allocation7 + $0x80] sm:$0xff]
    %v145 = vld [vmem:[#allocation7 + $0x88] sm:$0xff]
    %v146 = vld [vmem:[#allocation7 + $0x90] sm:$0xff]
    %v147 = vld [vmem:[#allocation7 + $0x98] sm:$0xff]
    %v148 = vld [vmem:[#allocation7 + $0xa0] sm:$0xff]
    %v149 = vld [vmem:[#allocation7 + $0xa8] sm:$0xff]
    %v150 = vld [vmem:[#allocation7 + $0xb0] sm:$0xff]
    %v151 = vld [vmem:[#allocation7 + $0xb8] sm:$0xff]
    %v152 = vld [vmem:[#allocation7 + $0xc0] sm:$0xff]
    %v153 = vld [vmem:[#allocation7 + $0xc8] sm:$0xff]
    %v154 = vld [vmem:[#allocation7 + $0xd0] sm:$0xff]
    %v155 = vld [vmem:[#allocation7 + $0xd8] sm:$0xff]
    %v156 = vld [vmem:[#allocation7 + $0xe0] sm:$0xff]
    %v157 = vld [vmem:[#allocation7 + $0xe8] sm:$0xff]
    %v158 = vld [vmem:[#allocation7 + $0xf0] sm:$0xff]
    %v159 = vld [vmem:[#allocation7 + $0xf8] sm:$0xff]
    %v160 = vld [vmem:[#allocation7 + $0x100] sm:$0xff]
    %v161 = vld [vmem:[#allocation7 + $0x108] sm:$0xff]
    %v162 = vld [vmem:[#allocation7 + $0x110] sm:$0xff]
    %v163 = vld [vmem:[#allocation7 + $0x118] sm:$0xff]
    %v164 = vld [vmem:[#allocation7 + $0x120] sm:$0xff]
    %v165 = vld [vmem:[#allocation7 + $0x128] sm:$0xff]
    %v166 = vld [vmem:[#allocation7 + $0x130] sm:$0xff]
    %v167 = vld [vmem:[#allocation7 + $0x138] sm:$0xff]
    %v168 = vld [vmem:[#allocation7 + $0x140] sm:$0xff]
    %v169 = vld [vmem:[#allocation7 + $0x148] sm:$0xff]
    %v170 = vld [vmem:[#allocation7 + $0x150] sm:$0xff]
    %v171 = vld [vmem:[#allocation7 + $0x158] sm:$0xff]
    %v172 = vld [vmem:[#allocation7 + $0x160] sm:$0xff]
    %v173 = vld [vmem:[#allocation7 + $0x168] sm:$0xff]
    %v174 = vld [vmem:[#allocation7 + $0x170] sm:$0xff]
    %v175 = vld [vmem:[#allocation7 + $0x178] sm:$0xff]
    %v176 = vld [vmem:[#allocation7 + $0x180] sm:$0xff]
    %v177 = vld [vmem:[#allocation7 + $0x188] sm:$0xff]
    %v178 = vld [vmem:[#allocation7 + $0x190] sm:$0xff]
    %v179 = vld [vmem:[#allocation7 + $0x198] sm:$0xff]
    %v180 = vld [vmem:[#allocation7 + $0x1a0] sm:$0xff]
    %v181 = vld [vmem:[#allocation7 + $0x1a8] sm:$0xff]
    %v182 = vld [vmem:[#allocation7 + $0x1b0] sm:$0xff]
    %v183 = vld [vmem:[#allocation7 + $0x1b8] sm:$0xff]
    %v184 = vld [vmem:[#allocation7 + $0x1c0] sm:$0xff]
    %v185 = vld [vmem:[#allocation7 + $0x1c8] sm:$0xff]
    %v186 = vld [vmem:[#allocation7 + $0x1d0] sm:$0xff]
    %v187 = vld [vmem:[#allocation7 + $0x1d8] sm:$0xff]
    %v188 = vld [vmem:[#allocation7 + $0x1e0] sm:$0xff]
    %v189 = vld [vmem:[#allocation7 + $0x1e8] sm:$0xff]
    %v190 = vld [vmem:[#allocation7 + $0x1f0] sm:$0xff]
    %v191 = vld [vmem:[#allocation7 + $0x1f8] sm:$0xff]
    %v192 = vld [vmem:[#allocation7 + $0x200] sm:$0xff]
    %v193 = vld [vmem:[#allocation7 + $0x208] sm:$0xff]
    %v194 = vld [vmem:[#allocation7 + $0x210] sm:$0xff]
    %v195 = vld [vmem:[#allocation7 + $0x218] sm:$0xff]
    %v196 = vld [vmem:[#allocation7 + $0x220] sm:$0xff]
    %v197 = vld [vmem:[#allocation7 + $0x228] sm:$0xff]
    %v198 = vld [vmem:[#allocation7 + $0x230] sm:$0xff]
    %v199 = vld [vmem:[#allocation7 + $0x238] sm:$0xff]
    %v200 = vld [vmem:[#allocation7 + $0x240] sm:$0xff]
    %v201 = vld [vmem:[#allocation7 + $0x248] sm:$0xff]
    %v202 = vld [vmem:[#allocation7 + $0x250] sm:$0xff]
    %v203 = vld [vmem:[#allocation7 + $0x258] sm:$0xff]
    %v204 = vld [vmem:[#allocation7 + $0x260] sm:$0xff]
    %v205 = vld [vmem:[#allocation7 + $0x268] sm:$0xff]
    %v206 = vld [vmem:[#allocation7 + $0x270] sm:$0xff]
    %v207 = vld [vmem:[#allocation7 + $0x278] sm:$0xff]
    %v208 = vld [vmem:[#allocation7 + $0x280] sm:$0xff]
    %v209 = vld [vmem:[#allocation7 + $0x288] sm:$0xff]
    %v210 = vld [vmem:[#allocation7 + $0x290] sm:$0xff]
    %v211 = vld [vmem:[#allocation7 + $0x298] sm:$0xff]
    %v212 = vld [vmem:[#allocation7 + $0x2a0] sm:$0xff]
    %v213 = vld [vmem:[#allocation7 + $0x2a8] sm:$0xff]
    %v214 = vld [vmem:[#allocation7 + $0x2b0] sm:$0xff]
    %v215 = vld [vmem:[#allocation7 + $0x2b8] sm:$0xff]
    %v216 = vld [vmem:[#allocation7 + $0x2c0] sm:$0xff]
    %v217 = vld [vmem:[#allocation7 + $0x2c8] sm:$0xff]
    %v218 = vld [vmem:[#allocation7 + $0x2d0] sm:$0xff]
    %v219 = vld [vmem:[#allocation7 + $0x2d8] sm:$0xff]
    %v220 = vld [vmem:[#allocation7 + $0x2e0] sm:$0xff]
    %v221 = vld [vmem:[#allocation7 + $0x2e8] sm:$0xff]
    %v222 = vld [vmem:[#allocation7 + $0x2f0] sm:$0xff]
    %v223 = vld [vmem:[#allocation7 + $0x2f8] sm:$0xff]
    %v224 = vld [vmem:[#allocation7 + $0x300] sm:$0xff]
    %v225 = vld [vmem:[#allocation7 + $0x308] sm:$0xff]
    %v226 = vld [vmem:[#allocation7 + $0x310] sm:$0xff]
    %v227 = vld [vmem:[#allocation7 + $0x318] sm:$0xff]
    %v228 = vld [vmem:[#allocation7 + $0x320] sm:$0xff]
    %v229 = vld [vmem:[#allocation7 + $0x328] sm:$0xff]
    %v230 = vld [vmem:[#allocation7 + $0x330] sm:$0xff]
    %v231 = vld [vmem:[#allocation7 + $0x338] sm:$0xff]
    %v232 = vld [vmem:[#allocation7 + $0x340] sm:$0xff]
    %v233 = vld [vmem:[#allocation7 + $0x348] sm:$0xff]
    %v234 = vld [vmem:[#allocation7 + $0x350] sm:$0xff]
    %v235 = vld [vmem:[#allocation7 + $0x358] sm:$0xff]
    %v236 = vld [vmem:[#allocation7 + $0x360] sm:$0xff]
    %v237 = vld [vmem:[#allocation7 + $0x368] sm:$0xff]
    %v238 = vld [vmem:[#allocation7 + $0x370] sm:$0xff]
    %v239 = vld [vmem:[#allocation7 + $0x378] sm:$0xff]
    %v240 = vld [vmem:[#allocation7 + $0x380] sm:$0xff]
    %v241 = vld [vmem:[#allocation7 + $0x388] sm:$0xff]
    %v242 = vld [vmem:[#allocation7 + $0x390] sm:$0xff]
    %v243 = vld [vmem:[#allocation7 + $0x398] sm:$0xff]
    %v244 = vld [vmem:[#allocation7 + $0x3a0] sm:$0xff]
    %v245 = vld [vmem:[#allocation7 + $0x3a8] sm:$0xff]
    %v246 = vld [vmem:[#allocation7 + $0x3b0] sm:$0xff]
    %v247 = vld [vmem:[#allocation7 + $0x3b8] sm:$0xff]
    %v248 = vld [vmem:[#allocation7 + $0x3c0] sm:$0xff]
    %v249 = vld [vmem:[#allocation7 + $0x3c8] sm:$0xff]
    %v250 = vld [vmem:[#allocation7 + $0x3d0] sm:$0xff]
    %v251 = vld [vmem:[#allocation7 + $0x3d8] sm:$0xff]
    %v252 = vld [vmem:[#allocation7 + $0x3e0] sm:$0xff]
    %v253 = vld [vmem:[#allocation7 + $0x3e8] sm:$0xff]
    %v254 = vld [vmem:[#allocation7 + $0x3f0] sm:$0xff]
    %v255 = vld [vmem:[#allocation7 + $0x3f8] sm:$0xff]
    %v256 = vld [vmem:[#allocation7 + $0x400] sm:$0xff]
    %v257 = vld [vmem:[#allocation7 + $0x408] sm:$0xff]
    %v258 = vld [vmem:[#allocation7 + $0x410] sm:$0xff]
    %v259 = vld [vmem:[#allocation7 + $0x418] sm:$0xff]
    %v260 = vld [vmem:[#allocation7 + $0x420] sm:$0xff]
    %v261 = vld [vmem:[#allocation7 + $0x428] sm:$0xff]
    %v262 = vld [vmem:[#allocation7 + $0x430] sm:$0xff]
    %v263 = vld [vmem:[#allocation7 + $0x438] sm:$0xff]
    %v264 = vld [vmem:[#allocation7 + $0x440] sm:$0xff]
    %v265 = vld [vmem:[#allocation7 + $0x448] sm:$0xff]
    %v266 = vld [vmem:[#allocation7 + $0x450] sm:$0xff]
    %v267 = vld [vmem:[#allocation7 + $0x458] sm:$0xff]
    %v268 = vld [vmem:[#allocation7 + $0x460] sm:$0xff]
    %v269 = vld [vmem:[#allocation7 + $0x468] sm:$0xff]
    %v270 = vld [vmem:[#allocation7 + $0x470] sm:$0xff]
    %v271 = vld [vmem:[#allocation7 + $0x478] sm:$0xff]
    %v272 = vld [vmem:[#allocation7 + $0x480] sm:$0xff]
    %v273 = vld [vmem:[#allocation7 + $0x488] sm:$0xff]
    %v274 = vld [vmem:[#allocation7 + $0x490] sm:$0xff]
    %v275 = vld [vmem:[#allocation7 + $0x498] sm:$0xff]
    %v276 = vld [vmem:[#allocation7 + $0x4a0] sm:$0xff]
    %v277 = vld [vmem:[#allocation7 + $0x4a8] sm:$0xff]
    %v278 = vld [vmem:[#allocation7 + $0x4b0] sm:$0xff]
    %v279 = vld [vmem:[#allocation7 + $0x4b8] sm:$0xff]
    %v280 = vld [vmem:[#allocation7 + $0x4c0] sm:$0xff]
    %v281 = vld [vmem:[#allocation7 + $0x4c8] sm:$0xff]
    %v282 = vld [vmem:[#allocation7 + $0x4d0] sm:$0xff]
    %v283 = vld [vmem:[#allocation7 + $0x4d8] sm:$0xff]
    %v284 = vld [vmem:[#allocation7 + $0x4e0] sm:$0xff]
    %v285 = vld [vmem:[#allocation7 + $0x4e8] sm:$0xff]
    %v286 = vld [vmem:[#allocation7 + $0x4f0] sm:$0xff]
    %v287 = vld [vmem:[#allocation7 + $0x4f8] sm:$0xff]
    %v288 = vld [vmem:[#allocation7 + $0x500] sm:$0xff]
    %v289 = vld [vmem:[#allocation7 + $0x508] sm:$0xff]
    %v290 = vld [vmem:[#allocation7 + $0x510] sm:$0xff]
    %v291 = vld [vmem:[#allocation7 + $0x518] sm:$0xff]
    %v292 = vld [vmem:[#allocation7 + $0x520] sm:$0xff]
    %v293 = vld [vmem:[#allocation7 + $0x528] sm:$0xff]
    %v294 = vld [vmem:[#allocation7 + $0x530] sm:$0xff]
    %v295 = vld [vmem:[#allocation7 + $0x538] sm:$0xff]
    %v296 = vld [vmem:[#allocation7 + $0x540] sm:$0xff]
    %v297 = vld [vmem:[#allocation7 + $0x548] sm:$0xff]
    %v298 = vld [vmem:[#allocation7 + $0x550] sm:$0xff]
    %v299 = vld [vmem:[#allocation7 + $0x558] sm:$0xff]
    %v300 = vld [vmem:[#allocation7 + $0x560] sm:$0xff]
    %v301 = vld [vmem:[#allocation7 + $0x568] sm:$0xff]
    %v302 = vld [vmem:[#allocation7 + $0x570] sm:$0xff]
    %v303 = vld [vmem:[#allocation7 + $0x578] sm:$0xff]
    %v304 = vld [vmem:[#allocation7 + $0x580] sm:$0xff]
    %v305 = vld [vmem:[#allocation7 + $0x588] sm:$0xff]
    %v306 = vld [vmem:[#allocation7 + $0x590] sm:$0xff]
    %v307 = vld [vmem:[#allocation7 + $0x598] sm:$0xff]
    %v308 = vld [vmem:[#allocation7 + $0x5a0] sm:$0xff]
    %v309 = vld [vmem:[#allocation7 + $0x5a8] sm:$0xff]
    %v310 = vld [vmem:[#allocation7 + $0x5b0] sm:$0xff]
    %v311 = vld [vmem:[#allocation7 + $0x5b8] sm:$0xff]
    %v312 = vld [vmem:[#allocation7 + $0x5c0] sm:$0xff]
    %v313 = vld [vmem:[#allocation7 + $0x5c8] sm:$0xff]
    %v314 = vld [vmem:[#allocation7 + $0x5d0] sm:$0xff]
    %v315 = vld [vmem:[#allocation7 + $0x5d8] sm:$0xff]
    %v316 = vld [vmem:[#allocation7 + $0x5e0] sm:$0xff]
    %v317 = vld [vmem:[#allocation7 + $0x5e8] sm:$0xff]
    %v318 = vld [vmem:[#allocation7 + $0x5f0] sm:$0xff]
    %v319 = vld [vmem:[#allocation7 + $0x5f8] sm:$0xff]
    %v320 = vld [vmem:[#allocation7 + $0x600] sm:$0xff]
    %v321 = vld [vmem:[#allocation7 + $0x608] sm:$0xff]
    %v322 = vld [vmem:[#allocation7 + $0x610] sm:$0xff]
    %v323 = vld [vmem:[#allocation7 + $0x618] sm:$0xff]
    %v520 = vunpack.c.l.b16 %v128
    %v521 = vunpack.c.h.b16 %v128
    %v522 = vunpack.c.l.b16 %v129
    %v523 = vunpack.c.h.b16 %v129
    %v524 = vunpack.c.l.b16 %v130
    %v525 = vunpack.c.h.b16 %v130
    %v526 = vunpack.c.l.b16 %v131
    %v527 = vunpack.c.h.b16 %v131
    %v528 = vunpack.c.l.b16 %v132
    %v529 = vunpack.c.h.b16 %v132
    %v530 = vunpack.c.l.b16 %v133
    %v531 = vunpack.c.h.b16 %v133
    %v532 = vunpack.c.l.b16 %v134
    %v533 = vunpack.c.h.b16 %v134
    %v534 = vunpack.c.l.b16 %v135
    %v535 = vunpack.c.h.b16 %v135
    %v536 = vunpack.c.l.b16 %v136
    %v537 = vunpack.c.h.b16 %v136
    %v538 = vunpack.c.l.b16 %v137
    %v539 = vunpack.c.h.b16 %v137
    %v540 = vunpack.c.l.b16 %v138
    %v541 = vunpack.c.h.b16 %v138
    %v542 = vunpack.c.l.b16 %v139
    %v543 = vunpack.c.h.b16 %v139
    %v544 = vunpack.c.l.b16 %v140
    %v545 = vunpack.c.h.b16 %v140
    %v546 = vunpack.c.l.b16 %v141
    %v547 = vunpack.c.h.b16 %v141
    %v548 = vunpack.c.l.b16 %v142
    %v549 = vunpack.c.h.b16 %v142
    %v550 = vunpack.c.l.b16 %v143
    %v551 = vunpack.c.h.b16 %v143
    %v552 = vunpack.c.l.b16 %v144
    %v553 = vunpack.c.h.b16 %v144
    %v554 = vunpack.c.l.b16 %v145
    %v555 = vunpack.c.h.b16 %v145
    %v556 = vunpack.c.l.b16 %v146
    %v557 = vunpack.c.h.b16 %v146
    %v558 = vunpack.c.l.b16 %v147
    %v559 = vunpack.c.h.b16 %v147
    %v560 = vunpack.c.l.b16 %v148
    %v561 = vunpack.c.h.b16 %v148
    %v562 = vunpack.c.l.b16 %v149
    %v563 = vunpack.c.h.b16 %v149
    %v564 = vunpack.c.l.b16 %v150
    %v565 = vunpack.c.h.b16 %v150
    %v566 = vunpack.c.l.b16 %v151
    %v567 = vunpack.c.h.b16 %v151
    %v568 = vunpack.c.l.b16 %v152
    %v569 = vunpack.c.h.b16 %v152
    %v570 = vunpack.c.l.b16 %v153
    %v571 = vunpack.c.h.b16 %v153
    %v572 = vunpack.c.l.b16 %v154
    %v573 = vunpack.c.h.b16 %v154
    %v574 = vunpack.c.l.b16 %v155
    %v575 = vunpack.c.h.b16 %v155
    %v576 = vunpack.c.l.b16 %v156
    %v577 = vunpack.c.h.b16 %v156
    %v578 = vunpack.c.l.b16 %v157
    %v579 = vunpack.c.h.b16 %v157
    %v580 = vunpack.c.l.b16 %v158
    %v581 = vunpack.c.h.b16 %v158
    %v582 = vunpack.c.l.b16 %v159
    %v583 = vunpack.c.h.b16 %v159
    %v584 = vunpack.c.l.b16 %v160
    %v585 = vunpack.c.h.b16 %v160
    %v586 = vunpack.c.l.b16 %v161
    %v587 = vunpack.c.h.b16 %v161
    %v588 = vunpack.c.l.b16 %v162
    %v589 = vunpack.c.h.b16 %v162
    %v590 = vunpack.c.l.b16 %v163
    %v591 = vunpack.c.h.b16 %v163
    %v592 = vunpack.c.l.b16 %v164
    %v593 = vunpack.c.h.b16 %v164
    %v594 = vunpack.c.l.b16 %v165
    %v595 = vunpack.c.h.b16 %v165
    %v596 = vunpack.c.l.b16 %v166
    %v597 = vunpack.c.h.b16 %v166
    %v598 = vunpack.c.l.b16 %v167
    %v599 = vunpack.c.h.b16 %v167
    %v600 = vunpack.c.l.b16 %v168
    %v601 = vunpack.c.h.b16 %v168
    %v602 = vunpack.c.l.b16 %v169
    %v603 = vunpack.c.h.b16 %v169
    %v604 = vunpack.c.l.b16 %v170
    %v605 = vunpack.c.h.b16 %v170
    %v606 = vunpack.c.l.b16 %v171
    %v607 = vunpack.c.h.b16 %v171
    %v608 = vunpack.c.l.b16 %v172
    %v609 = vunpack.c.h.b16 %v172
    %v610 = vunpack.c.l.b16 %v173
    %v611 = vunpack.c.h.b16 %v173
    %v612 = vunpack.c.l.b16 %v174
    %v613 = vunpack.c.h.b16 %v174
    %v614 = vunpack.c.l.b16 %v175
    %v615 = vunpack.c.h.b16 %v175
    %v616 = vunpack.c.l.b16 %v176
    %v617 = vunpack.c.h.b16 %v176
    %v618 = vunpack.c.l.b16 %v177
    %v619 = vunpack.c.h.b16 %v177
    %v620 = vunpack.c.l.b16 %v178
    %v621 = vunpack.c.h.b16 %v178
    %v622 = vunpack.c.l.b16 %v179
    %v623 = vunpack.c.h.b16 %v179
    %v624 = vunpack.c.l.b16 %v180
    %v625 = vunpack.c.h.b16 %v180
    %v626 = vunpack.c.l.b16 %v181
    %v627 = vunpack.c.h.b16 %v181
    %v628 = vunpack.c.l.b16 %v182
    %v629 = vunpack.c.h.b16 %v182
    %v630 = vunpack.c.l.b16 %v183
    %v631 = vunpack.c.h.b16 %v183
    %v632 = vunpack.c.l.b16 %v184
    %v633 = vunpack.c.h.b16 %v184
    %v634 = vunpack.c.l.b16 %v185
    %v635 = vunpack.c.h.b16 %v185
    %v636 = vunpack.c.l.b16 %v186
    %v637 = vunpack.c.h.b16 %v186
    %v638 = vunpack.c.l.b16 %v187
    %v639 = vunpack.c.h.b16 %v187
    %v640 = vunpack.c.l.b16 %v188
    %v641 = vunpack.c.h.b16 %v188
    %v642 = vunpack.c.l.b16 %v189
    %v643 = vunpack.c.h.b16 %v189
    %v644 = vunpack.c.l.b16 %v190
    %v645 = vunpack.c.h.b16 %v190
    %v646 = vunpack.c.l.b16 %v191
    %v647 = vunpack.c.h.b16 %v191
    %v648 = vunpack.c.l.b16 %v192
    %v649 = vunpack.c.h.b16 %v192
    %v650 = vunpack.c.l.b16 %v193
    %v651 = vunpack.c.h.b16 %v193
    %v652 = vunpack.c.l.b16 %v194
    %v653 = vunpack.c.h.b16 %v194
    %v654 = vunpack.c.l.b16 %v195
    %v655 = vunpack.c.h.b16 %v195
    %v656 = vunpack.c.l.b16 %v196
    %v657 = vunpack.c.h.b16 %v196
    %v658 = vunpack.c.l.b16 %v197
    %v659 = vunpack.c.h.b16 %v197
    %v660 = vunpack.c.l.b16 %v198
    %v661 = vunpack.c.h.b16 %v198
    %v662 = vunpack.c.l.b16 %v199
    %v663 = vunpack.c.h.b16 %v199
    %v664 = vunpack.c.l.b16 %v200
    %v665 = vunpack.c.h.b16 %v200
    %v666 = vunpack.c.l.b16 %v201
    %v667 = vunpack.c.h.b16 %v201
    %v668 = vunpack.c.l.b16 %v202
    %v669 = vunpack.c.h.b16 %v202
    %v670 = vunpack.c.l.b16 %v203
    %v671 = vunpack.c.h.b16 %v203
    %v672 = vunpack.c.l.b16 %v204
    %v673 = vunpack.c.h.b16 %v204
    %v674 = vunpack.c.l.b16 %v205
    %v675 = vunpack.c.h.b16 %v205
    %v676 = vunpack.c.l.b16 %v206
    %v677 = vunpack.c.h.b16 %v206
    %v678 = vunpack.c.l.b16 %v207
    %v679 = vunpack.c.h.b16 %v207
    %v680 = vunpack.c.l.b16 %v208
    %v681 = vunpack.c.h.b16 %v208
    %v682 = vunpack.c.l.b16 %v209
    %v683 = vunpack.c.h.b16 %v209
    %v684 = vunpack.c.l.b16 %v210
    %v685 = vunpack.c.h.b16 %v210
    %v686 = vunpack.c.l.b16 %v211
    %v687 = vunpack.c.h.b16 %v211
    %v688 = vunpack.c.l.b16 %v212
    %v689 = vunpack.c.h.b16 %v212
    %v690 = vunpack.c.l.b16 %v213
    %v691 = vunpack.c.h.b16 %v213
    %v692 = vunpack.c.l.b16 %v214
    %v693 = vunpack.c.h.b16 %v214
    %v694 = vunpack.c.l.b16 %v215
    %v695 = vunpack.c.h.b16 %v215
    %v696 = vunpack.c.l.b16 %v216
    %v697 = vunpack.c.h.b16 %v216
    %v698 = vunpack.c.l.b16 %v217
    %v699 = vunpack.c.h.b16 %v217
    %v700 = vunpack.c.l.b16 %v218
    %v701 = vunpack.c.h.b16 %v218
    %v702 = vunpack.c.l.b16 %v219
    %v703 = vunpack.c.h.b16 %v219
    %v704 = vunpack.c.l.b16 %v220
    %v705 = vunpack.c.h.b16 %v220
    %v706 = vunpack.c.l.b16 %v221
    %v707 = vunpack.c.h.b16 %v221
    %v708 = vunpack.c.l.b16 %v222
    %v709 = vunpack.c.h.b16 %v222
    %v710 = vunpack.c.l.b16 %v223
    %v711 = vunpack.c.h.b16 %v223
    %v712 = vunpack.c.l.b16 %v224
    %v713 = vunpack.c.h.b16 %v224
    %v714 = vunpack.c.l.b16 %v225
    %v715 = vunpack.c.h.b16 %v225
    %v716 = vunpack.c.l.b16 %v226
    %v717 = vunpack.c.h.b16 %v226
    %v718 = vunpack.c.l.b16 %v227
    %v719 = vunpack.c.h.b16 %v227
    %v720 = vunpack.c.l.b16 %v228
    %v721 = vunpack.c.h.b16 %v228
    %v722 = vunpack.c.l.b16 %v229
    %v723 = vunpack.c.h.b16 %v229
    %v724 = vunpack.c.l.b16 %v230
    %v725 = vunpack.c.h.b16 %v230
    %v726 = vunpack.c.l.b16 %v231
    %v727 = vunpack.c.h.b16 %v231
    %v728 = vunpack.c.l.b16 %v232
    %v729 = vunpack.c.h.b16 %v232
    %v730 = vunpack.c.l.b16 %v233
    %v731 = vunpack.c.h.b16 %v233
    %v732 = vunpack.c.l.b16 %v234
    %v733 = vunpack.c.h.b16 %v234
    %v734 = vunpack.c.l.b16 %v235
    %v735 = vunpack.c.h.b16 %v235
    %v736 = vunpack.c.l.b16 %v236
    %v737 = vunpack.c.h.b16 %v236
    %v738 = vunpack.c.l.b16 %v237
    %v739 = vunpack.c.h.b16 %v237
    %v740 = vunpack.c.l.b16 %v238
    %v741 = vunpack.c.h.b16 %v238
    %v742 = vunpack.c.l.b16 %v239
    %v743 = vunpack.c.h.b16 %v239
    %v744 = vunpack.c.l.b16 %v240
    %v745 = vunpack.c.h.b16 %v240
    %v746 = vunpack.c.l.b16 %v241
    %v747 = vunpack.c.h.b16 %v241
    %v748 = vunpack.c.l.b16 %v242
    %v749 = vunpack.c.h.b16 %v242
    %v750 = vunpack.c.l.b16 %v243
    %v751 = vunpack.c.h.b16 %v243
    %v752 = vunpack.c.l.b16 %v244
    %v753 = vunpack.c.h.b16 %v244
    %v754 = vunpack.c.l.b16 %v245
    %v755 = vunpack.c.h.b16 %v245
    %v756 = vunpack.c.l.b16 %v246
    %v757 = vunpack.c.h.b16 %v246
    %v758 = vunpack.c.l.b16 %v247
    %v759 = vunpack.c.h.b16 %v247
    %v760 = vunpack.c.l.b16 %v248
    %v761 = vunpack.c.h.b16 %v248
    %v762 = vunpack.c.l.b16 %v249
    %v763 = vunpack.c.h.b16 %v249
    %v764 = vunpack.c.l.b16 %v250
    %v765 = vunpack.c.h.b16 %v250
    %v766 = vunpack.c.l.b16 %v251
    %v767 = vunpack.c.h.b16 %v251
    %v768 = vunpack.c.l.b16 %v252
    %v769 = vunpack.c.h.b16 %v252
    %v770 = vunpack.c.l.b16 %v253
    %v771 = vunpack.c.h.b16 %v253
    %v772 = vunpack.c.l.b16 %v254
    %v773 = vunpack.c.h.b16 %v254
    %v774 = vunpack.c.l.b16 %v255
    %v775 = vunpack.c.h.b16 %v255
    %v776 = vunpack.c.l.b16 %v256
    %v777 = vunpack.c.h.b16 %v256
    %v778 = vunpack.c.l.b16 %v257
    %v779 = vunpack.c.h.b16 %v257
    %v780 = vunpack.c.l.b16 %v258
    %v781 = vunpack.c.h.b16 %v258
    %v782 = vunpack.c.l.b16 %v259
    %v783 = vunpack.c.h.b16 %v259
    %v784 = vunpack.c.l.b16 %v260
    %v785 = vunpack.c.h.b16 %v260
    %v786 = vunpack.c.l.b16 %v261
    %v787 = vunpack.c.h.b16 %v261
    %v788 = vunpack.c.l.b16 %v262
    %v789 = vunpack.c.h.b16 %v262
    %v790 = vunpack.c.l.b16 %v263
    %v791 = vunpack.c.h.b16 %v263
    %v792 = vunpack.c.l.b16 %v264
    %v793 = vunpack.c.h.b16 %v264
    %v794 = vunpack.c.l.b16 %v265
    %v795 = vunpack.c.h.b16 %v265
    %v796 = vunpack.c.l.b16 %v266
    %v797 = vunpack.c.h.b16 %v266
    %v798 = vunpack.c.l.b16 %v267
    %v799 = vunpack.c.h.b16 %v267
    %v800 = vunpack.c.l.b16 %v268
    %v801 = vunpack.c.h.b16 %v268
    %v802 = vunpack.c.l.b16 %v269
    %v803 = vunpack.c.h.b16 %v269
    %v804 = vunpack.c.l.b16 %v270
    %v805 = vunpack.c.h.b16 %v270
    %v806 = vunpack.c.l.b16 %v271
    %v807 = vunpack.c.h.b16 %v271
    %v808 = vunpack.c.l.b16 %v272
    %v809 = vunpack.c.h.b16 %v272
    %v810 = vunpack.c.l.b16 %v273
    %v811 = vunpack.c.h.b16 %v273
    %v812 = vunpack.c.l.b16 %v274
    %v813 = vunpack.c.h.b16 %v274
    %v814 = vunpack.c.l.b16 %v275
    %v815 = vunpack.c.h.b16 %v275
    %v816 = vunpack.c.l.b16 %v276
    %v817 = vunpack.c.h.b16 %v276
    %v818 = vunpack.c.l.b16 %v277
    %v819 = vunpack.c.h.b16 %v277
    %v820 = vunpack.c.l.b16 %v278
    %v821 = vunpack.c.h.b16 %v278
    %v822 = vunpack.c.l.b16 %v279
    %v823 = vunpack.c.h.b16 %v279
    %v824 = vunpack.c.l.b16 %v280
    %v825 = vunpack.c.h.b16 %v280
    %v826 = vunpack.c.l.b16 %v281
    %v827 = vunpack.c.h.b16 %v281
    %v828 = vunpack.c.l.b16 %v282
    %v829 = vunpack.c.h.b16 %v282
    %v830 = vunpack.c.l.b16 %v283
    %v831 = vunpack.c.h.b16 %v283
    %v832 = vunpack.c.l.b16 %v284
    %v833 = vunpack.c.h.b16 %v284
    %v834 = vunpack.c.l.b16 %v285
    %v835 = vunpack.c.h.b16 %v285
    %v836 = vunpack.c.l.b16 %v286
    %v837 = vunpack.c.h.b16 %v286
    %v838 = vunpack.c.l.b16 %v287
    %v839 = vunpack.c.h.b16 %v287
    %v840 = vunpack.c.l.b16 %v288
    %v841 = vunpack.c.h.b16 %v288
    %v842 = vunpack.c.l.b16 %v289
    %v843 = vunpack.c.h.b16 %v289
    %v844 = vunpack.c.l.b16 %v290
    %v845 = vunpack.c.h.b16 %v290
    %v846 = vunpack.c.l.b16 %v291
    %v847 = vunpack.c.h.b16 %v291
    %v848 = vunpack.c.l.b16 %v292
    %v849 = vunpack.c.h.b16 %v292
    %v850 = vunpack.c.l.b16 %v293
    %v851 = vunpack.c.h.b16 %v293
    %v852 = vunpack.c.l.b16 %v294
    %v853 = vunpack.c.h.b16 %v294
    %v854 = vunpack.c.l.b16 %v295
    %v855 = vunpack.c.h.b16 %v295
    %v856 = vunpack.c.l.b16 %v296
    %v857 = vunpack.c.h.b16 %v296
    %v858 = vunpack.c.l.b16 %v297
    %v859 = vunpack.c.h.b16 %v297
    %v860 = vunpack.c.l.b16 %v298
    %v861 = vunpack.c.h.b16 %v298
    %v862 = vunpack.c.l.b16 %v299
    %v863 = vunpack.c.h.b16 %v299
    %v864 = vunpack.c.l.b16 %v300
    %v865 = vunpack.c.h.b16 %v300
    %v866 = vunpack.c.l.b16 %v301
    %v867 = vunpack.c.h.b16 %v301
    %v868 = vunpack.c.l.b16 %v302
    %v869 = vunpack.c.h.b16 %v302
    %v870 = vunpack.c.l.b16 %v303
    %v871 = vunpack.c.h.b16 %v303
    %v872 = vunpack.c.l.b16 %v304
    %v873 = vunpack.c.h.b16 %v304
    %v874 = vunpack.c.l.b16 %v305
    %v875 = vunpack.c.h.b16 %v305
    %v876 = vunpack.c.l.b16 %v306
    %v877 = vunpack.c.h.b16 %v306
    %v878 = vunpack.c.l.b16 %v307
    %v879 = vunpack.c.h.b16 %v307
    %v880 = vunpack.c.l.b16 %v308
    %v881 = vunpack.c.h.b16 %v308
    %v882 = vunpack.c.l.b16 %v309
    %v883 = vunpack.c.h.b16 %v309
    %v884 = vunpack.c.l.b16 %v310
    %v885 = vunpack.c.h.b16 %v310
    %v886 = vunpack.c.l.b16 %v311
    %v887 = vunpack.c.h.b16 %v311
    %v888 = vunpack.c.l.b16 %v312
    %v889 = vunpack.c.h.b16 %v312
    %v890 = vunpack.c.l.b16 %v313
    %v891 = vunpack.c.h.b16 %v313
    %v892 = vunpack.c.l.b16 %v314
    %v893 = vunpack.c.h.b16 %v314
    %v894 = vunpack.c.l.b16 %v315
    %v895 = vunpack.c.h.b16 %v315
    %v896 = vunpack.c.l.b16 %v316
    %v897 = vunpack.c.h.b16 %v316
    %v898 = vunpack.c.l.b16 %v317
    %v899 = vunpack.c.h.b16 %v317
    %v900 = vunpack.c.l.b16 %v318
    %v901 = vunpack.c.h.b16 %v318
    %v902 = vunpack.c.l.b16 %v319
    %v903 = vunpack.c.h.b16 %v319
    %v904 = vunpack.c.l.b16 %v320
    %v905 = vunpack.c.h.b16 %v320
    %v906 = vunpack.c.l.b16 %v321
    %v907 = vunpack.c.h.b16 %v321
    %v908 = vunpack.c.l.b16 %v322
    %v909 = vunpack.c.h.b16 %v322
    %v910 = vunpack.c.l.b16 %v323
    %v911 = vunpack.c.h.b16 %v323
    %v912 = vpack.c.b16 %v524, %v520
    %v913 = vpack.c.b16 %v525, %v521
    %v914 = vpack.c.b16 %v526, %v522
    %v915 = vpack.c.b16 %v527, %v523
    %v916 = vpack.c.b16 %v532, %v528
    %v917 = vpack.c.b16 %v533, %v529
    %v918 = vpack.c.b16 %v534, %v530
    %v919 = vpack.c.b16 %v535, %v531
    %v920 = vpack.c.b16 %v540, %v536
    %v921 = vpack.c.b16 %v541, %v537
    %v922 = vpack.c.b16 %v542, %v538
    %v923 = vpack.c.b16 %v543, %v539
    %v924 = vpack.c.b16 %v548, %v544
    %v925 = vpack.c.b16 %v549, %v545
    %v926 = vpack.c.b16 %v550, %v546
    %v927 = vpack.c.b16 %v551, %v547
    %v928 = vpack.c.b16 %v556, %v552
    %v929 = vpack.c.b16 %v557, %v553
    %v930 = vpack.c.b16 %v558, %v554
    %v931 = vpack.c.b16 %v559, %v555
    %v932 = vpack.c.b16 %v564, %v560
    %v933 = vpack.c.b16 %v565, %v561
    %v934 = vpack.c.b16 %v566, %v562
    %v935 = vpack.c.b16 %v567, %v563
    %v936 = vpack.c.b16 %v572, %v568
    %v937 = vpack.c.b16 %v573, %v569
    %v938 = vpack.c.b16 %v574, %v570
    %v939 = vpack.c.b16 %v575, %v571
    %v940 = vpack.c.b16 %v580, %v576
    %v941 = vpack.c.b16 %v581, %v577
    %v942 = vpack.c.b16 %v582, %v578
    %v943 = vpack.c.b16 %v583, %v579
    %v944 = vpack.c.b16 %v588, %v584
    %v945 = vpack.c.b16 %v589, %v585
    %v946 = vpack.c.b16 %v590, %v586
    %v947 = vpack.c.b16 %v591, %v587
    %v948 = vpack.c.b16 %v596, %v592
    %v949 = vpack.c.b16 %v597, %v593
    %v950 = vpack.c.b16 %v598, %v594
    %v951 = vpack.c.b16 %v599, %v595
    %v952 = vpack.c.b16 %v604, %v600
    %v953 = vpack.c.b16 %v605, %v601
    %v954 = vpack.c.b16 %v606, %v602
    %v955 = vpack.c.b16 %v607, %v603
    %v956 = vpack.c.b16 %v612, %v608
    %v957 = vpack.c.b16 %v613, %v609
    %v958 = vpack.c.b16 %v614, %v610
    %v959 = vpack.c.b16 %v615, %v611
    %v960 = vpack.c.b16 %v620, %v616
    %v961 = vpack.c.b16 %v621, %v617
    %v962 = vpack.c.b16 %v622, %v618
    %v963 = vpack.c.b16 %v623, %v619
    %v964 = vpack.c.b16 %v628, %v624
    %v965 = vpack.c.b16 %v629, %v625
    %v966 = vpack.c.b16 %v630, %v626
    %v967 = vpack.c.b16 %v631, %v627
    %v968 = vpack.c.b16 %v636, %v632
    %v969 = vpack.c.b16 %v637, %v633
    %v970 = vpack.c.b16 %v638, %v634
    %v971 = vpack.c.b16 %v639, %v635
    %v972 = vpack.c.b16 %v644, %v640
    %v973 = vpack.c.b16 %v645, %v641
    %v974 = vpack.c.b16 %v646, %v642
    %v975 = vpack.c.b16 %v647, %v643
    %v976 = vpack.c.b16 %v652, %v648
    %v977 = vpack.c.b16 %v653, %v649
    %v978 = vpack.c.b16 %v654, %v650
    %v979 = vpack.c.b16 %v655, %v651
    %v980 = vpack.c.b16 %v660, %v656
    %v981 = vpack.c.b16 %v661, %v657
    %v982 = vpack.c.b16 %v662, %v658
    %v983 = vpack.c.b16 %v663, %v659
    %v984 = vpack.c.b16 %v668, %v664
    %v985 = vpack.c.b16 %v669, %v665
    %v986 = vpack.c.b16 %v670, %v666
    %v987 = vpack.c.b16 %v671, %v667
    %v988 = vpack.c.b16 %v676, %v672
    %v989 = vpack.c.b16 %v677, %v673
    %v990 = vpack.c.b16 %v678, %v674
    %v991 = vpack.c.b16 %v679, %v675
    %v992 = vpack.c.b16 %v684, %v680
    %v993 = vpack.c.b16 %v685, %v681
    %v994 = vpack.c.b16 %v686, %v682
    %v995 = vpack.c.b16 %v687, %v683
    %v996 = vpack.c.b16 %v692, %v688
    %v997 = vpack.c.b16 %v693, %v689
    %v998 = vpack.c.b16 %v694, %v690
    %v999 = vpack.c.b16 %v695, %v691
    %v1000 = vpack.c.b16 %v700, %v696
    %v1001 = vpack.c.b16 %v701, %v697
    %v1002 = vpack.c.b16 %v702, %v698
    %v1003 = vpack.c.b16 %v703, %v699
    %v1004 = vpack.c.b16 %v708, %v704
    %v1005 = vpack.c.b16 %v709, %v705
    %v1006 = vpack.c.b16 %v710, %v706
    %v1007 = vpack.c.b16 %v711, %v707
    %v1008 = vpack.c.b16 %v716, %v712
    %v1009 = vpack.c.b16 %v717, %v713
    %v1010 = vpack.c.b16 %v718, %v714
    %v1011 = vpack.c.b16 %v719, %v715
    %v1012 = vpack.c.b16 %v724, %v720
    %v1013 = vpack.c.b16 %v725, %v721
    %v1014 = vpack.c.b16 %v726, %v722
    %v1015 = vpack.c.b16 %v727, %v723
    %v1016 = vpack.c.b16 %v732, %v728
    %v1017 = vpack.c.b16 %v733, %v729
    %v1018 = vpack.c.b16 %v734, %v730
    %v1019 = vpack.c.b16 %v735, %v731
    %v1020 = vpack.c.b16 %v740, %v736
    %v1021 = vpack.c.b16 %v741, %v737
    %v1022 = vpack.c.b16 %v742, %v738
    %v1023 = vpack.c.b16 %v743, %v739
    %v1024 = vpack.c.b16 %v748, %v744
    %v1025 = vpack.c.b16 %v749, %v745
    %v1026 = vpack.c.b16 %v750, %v746
    %v1027 = vpack.c.b16 %v751, %v747
    %v1028 = vpack.c.b16 %v756, %v752
    %v1029 = vpack.c.b16 %v757, %v753
    %v1030 = vpack.c.b16 %v758, %v754
    %v1031 = vpack.c.b16 %v759, %v755
    %v1032 = vpack.c.b16 %v764, %v760
    %v1033 = vpack.c.b16 %v765, %v761
    %v1034 = vpack.c.b16 %v766, %v762
    %v1035 = vpack.c.b16 %v767, %v763
    %v1036 = vpack.c.b16 %v772, %v768
    %v1037 = vpack.c.b16 %v773, %v769
    %v1038 = vpack.c.b16 %v774, %v770
    %v1039 = vpack.c.b16 %v775, %v771
    %v1040 = vpack.c.b16 %v780, %v776
    %v1041 = vpack.c.b16 %v781, %v777
    %v1042 = vpack.c.b16 %v782, %v778
    %v1043 = vpack.c.b16 %v783, %v779
    %v1044 = vpack.c.b16 %v788, %v784
    %v1045 = vpack.c.b16 %v789, %v785
    %v1046 = vpack.c.b16 %v790, %v786
    %v1047 = vpack.c.b16 %v791, %v787
    %v1048 = vpack.c.b16 %v796, %v792
    %v1049 = vpack.c.b16 %v797, %v793
    %v1050 = vpack.c.b16 %v798, %v794
    %v1051 = vpack.c.b16 %v799, %v795
    %v1052 = vpack.c.b16 %v804, %v800
    %v1053 = vpack.c.b16 %v805, %v801
    %v1054 = vpack.c.b16 %v806, %v802
    %v1055 = vpack.c.b16 %v807, %v803
    %v1056 = vpack.c.b16 %v812, %v808
    %v1057 = vpack.c.b16 %v813, %v809
    %v1058 = vpack.c.b16 %v814, %v810
    %v1059 = vpack.c.b16 %v815, %v811
    %v1060 = vpack.c.b16 %v820, %v816
    %v1061 = vpack.c.b16 %v821, %v817
    %v1062 = vpack.c.b16 %v822, %v818
    %v1063 = vpack.c.b16 %v823, %v819
    %v1064 = vpack.c.b16 %v828, %v824
    %v1065 = vpack.c.b16 %v829, %v825
    %v1066 = vpack.c.b16 %v830, %v826
    %v1067 = vpack.c.b16 %v831, %v827
    %v1068 = vpack.c.b16 %v836, %v832
    %v1069 = vpack.c.b16 %v837, %v833
    %v1070 = vpack.c.b16 %v838, %v834
    %v1071 = vpack.c.b16 %v839, %v835
    %v1072 = vpack.c.b16 %v844, %v840
    %v1073 = vpack.c.b16 %v845, %v841
    %v1074 = vpack.c.b16 %v846, %v842
    %v1075 = vpack.c.b16 %v847, %v843
    %v1076 = vpack.c.b16 %v852, %v848
    %v1077 = vpack.c.b16 %v853, %v849
    %v1078 = vpack.c.b16 %v854, %v850
    %v1079 = vpack.c.b16 %v855, %v851
    %v1080 = vpack.c.b16 %v860, %v856
    %v1081 = vpack.c.b16 %v861, %v857
    %v1082 = vpack.c.b16 %v862, %v858
    %v1083 = vpack.c.b16 %v863, %v859
    %v1084 = vpack.c.b16 %v868, %v864
    %v1085 = vpack.c.b16 %v869, %v865
    %v1086 = vpack.c.b16 %v870, %v866
    %v1087 = vpack.c.b16 %v871, %v867
    %v1088 = vpack.c.b16 %v876, %v872
    %v1089 = vpack.c.b16 %v877, %v873
    %v1090 = vpack.c.b16 %v878, %v874
    %v1091 = vpack.c.b16 %v879, %v875
    %v1092 = vpack.c.b16 %v884, %v880
    %v1093 = vpack.c.b16 %v885, %v881
    %v1094 = vpack.c.b16 %v886, %v882
    %v1095 = vpack.c.b16 %v887, %v883
    %v1096 = vpack.c.b16 %v892, %v888
    %v1097 = vpack.c.b16 %v893, %v889
    %v1098 = vpack.c.b16 %v894, %v890
    %v1099 = vpack.c.b16 %v895, %v891
    %v1100 = vpack.c.b16 %v900, %v896
    %v1101 = vpack.c.b16 %v901, %v897
    %v1102 = vpack.c.b16 %v902, %v898
    %v1103 = vpack.c.b16 %v903, %v899
    %v1104 = vpack.c.b16 %v908, %v904
    %v1105 = vpack.c.b16 %v909, %v905
    %v1106 = vpack.c.b16 %v910, %v906
    %v1107 = vpack.c.b16 %v911, %v907
    %vm1304 = vcmask 130048
    %v1306 = vsel %vm1304, %v127, 0
    %1308 = vmatprep.subr.bf16.mxu0 %v941
    %1309 = vmatpush1.bf16.msra.mxu0 %v940
    %1310 = vmatprep.subr.bf16.mxu0 %v937
    %1311 = vmatpush1.bf16.msra.mxu0 %v936
    %1312 = vmatprep.subr.bf16.mxu0 %v933
    %1313 = vmatpush1.bf16.msra.mxu0 %v932
    %1314 = vmatprep.subr.bf16.mxu0 %v929
    %1315 = vmatpush1.bf16.msra.mxu0 %v928
    %1316 = vmatprep.subr.bf16.mxu0 %v925
    %1317 = vmatpush1.bf16.msra.mxu0 %v924
    %1318 = vmatprep.subr.bf16.mxu0 %v921
    %1319 = vmatpush1.bf16.msra.mxu0 %v920
    %1320 = vmatprep.subr.bf16.mxu0 %v917
    %1321 = vmatpush1.bf16.msra.mxu0 %v916
    %1322 = vmatprep.subr.bf16.mxu0 %v913
    %1323 = vmatpush1.bf16.msra.mxu0 %v912
    %1324 = vmatprep.subr.bf16.mxu0 %v973
    %1325 = vmatpush2.bf16.msra.mxu0 %v972
    %1326 = vmatprep.subr.bf16.mxu0 %v969
    %1327 = vmatpush2.bf16.msra.mxu0 %v968
    %1328 = vmatprep.subr.bf16.mxu0 %v965
    %1329 = vmatpush2.bf16.msra.mxu0 %v964
    %1330 = vmatprep.subr.bf16.mxu0 %v961
    %1331 = vmatpush2.bf16.msra.mxu0 %v960
    %1332 = vmatprep.subr.bf16.mxu0 %v957
    %1333 = vmatpush2.bf16.msra.mxu0 %v956
    %1334 = vmatprep.subr.bf16.mxu0 %v953
    %1335 = vmatpush2.bf16.msra.mxu0 %v952
    %1336 = vmatprep.subr.bf16.mxu0 %v949
    %1337 = vmatpush2.bf16.msra.mxu0 %v948
    %1338 = vmatprep.subr.bf16.mxu0 %v945
    %1339 = vmatpush2.bf16.msra.mxu0 %v944
    %1340 = vmatprep.mubr.bf16.mxu0 %v122
    %1341 = vmatmul.mubr.bf16.gmra.mxu0 %v121
    %v1342 = vpop.f32.mrf.mxu0
    %v1343 = vadd.f32 0.0, %v1342
    %v1344 = vpop.f32.mrf.mxu0
    %v1345 = vadd.f32 0.0, %v1344
    %v1346 = vpop.f32.mrf.mxu0
    %v1347 = vpop.f32.mrf.mxu0
    %1348 = vdwg.mxu0
    %1349 = vmatprep.subr.bf16.mxu0 %v1005
    %1350 = vmatpush1.bf16.msra.mxu0 %v1004
    %1351 = vmatprep.subr.bf16.mxu0 %v1001
    %1352 = vmatpush1.bf16.msra.mxu0 %v1000
    %1353 = vmatprep.subr.bf16.mxu0 %v997
    %1354 = vmatpush1.bf16.msra.mxu0 %v996
    %1355 = vmatprep.subr.bf16.mxu0 %v993
    %1356 = vmatpush1.bf16.msra.mxu0 %v992
    %1357 = vmatprep.subr.bf16.mxu0 %v989
    %1358 = vmatpush1.bf16.msra.mxu0 %v988
    %1359 = vmatprep.subr.bf16.mxu0 %v985
    %1360 = vmatpush1.bf16.msra.mxu0 %v984
    %1361 = vmatprep.subr.bf16.mxu0 %v981
    %1362 = vmatpush1.bf16.msra.mxu0 %v980
    %1363 = vmatprep.subr.bf16.mxu0 %v977
    %1364 = vmatpush1.bf16.msra.mxu0 %v976
    %1365 = vmatprep.subr.bf16.mxu0 %v1037
    %1366 = vmatpush2.bf16.msra.mxu0 %v1036
    %1367 = vmatprep.subr.bf16.mxu0 %v1033
    %1368 = vmatpush2.bf16.msra.mxu0 %v1032
    %1369 = vmatprep.subr.bf16.mxu0 %v1029
    %1370 = vmatpush2.bf16.msra.mxu0 %v1028
    %1371 = vmatprep.subr.bf16.mxu0 %v1025
    %1372 = vmatpush2.bf16.msra.mxu0 %v1024
    %1373 = vmatprep.subr.bf16.mxu0 %v1021
    %1374 = vmatpush2.bf16.msra.mxu0 %v1020
    %1375 = vmatprep.subr.bf16.mxu0 %v1017
    %1376 = vmatpush2.bf16.msra.mxu0 %v1016
    %1377 = vmatprep.subr.bf16.mxu0 %v1013
    %1378 = vmatpush2.bf16.msra.mxu0 %v1012
    %1379 = vmatprep.subr.bf16.mxu0 %v1009
    %1380 = vmatpush2.bf16.msra.mxu0 %v1008
    %1381 = vmatprep.mubr.bf16.mxu0 %v124
    %1382 = vmatmul.mubr.bf16.gmra.mxu0 %v123
    %v1383 = vpop.f32.mrf.mxu0
    %v1384 = vadd.f32 %v1343, %v1383
    %v1385 = vpop.f32.mrf.mxu0
    %v1386 = vadd.f32 %v1345, %v1385
    %v1387 = vpop.f32.mrf.mxu0
    %v1388 = vpop.f32.mrf.mxu0
    %1389 = vdwg.mxu0
    %1390 = vmatprep.subr.bf16.mxu0 %v1069
    %1391 = vmatpush1.bf16.msra.mxu0 %v1068
    %1392 = vmatprep.subr.bf16.mxu0 %v1065
    %1393 = vmatpush1.bf16.msra.mxu0 %v1064
    %1394 = vmatprep.subr.bf16.mxu0 %v1061
    %1395 = vmatpush1.bf16.msra.mxu0 %v1060
    %1396 = vmatprep.subr.bf16.mxu0 %v1057
    %1397 = vmatpush1.bf16.msra.mxu0 %v1056
    %1398 = vmatprep.subr.bf16.mxu0 %v1053
    %1399 = vmatpush1.bf16.msra.mxu0 %v1052
    %1400 = vmatprep.subr.bf16.mxu0 %v1049
    %1401 = vmatpush1.bf16.msra.mxu0 %v1048
    %1402 = vmatprep.subr.bf16.mxu0 %v1045
    %1403 = vmatpush1.bf16.msra.mxu0 %v1044
    %1404 = vmatprep.subr.bf16.mxu0 %v1041
    %1405 = vmatpush1.bf16.msra.mxu0 %v1040
    %1406 = vmatprep.subr.bf16.mxu0 %v1101
    %1407 = vmatpush2.bf16.msra.mxu0 %v1100
    %1408 = vmatprep.subr.bf16.mxu0 %v1097
    %1409 = vmatpush2.bf16.msra.mxu0 %v1096
    %1410 = vmatprep.subr.bf16.mxu0 %v1093
    %1411 = vmatpush2.bf16.msra.mxu0 %v1092
    %1412 = vmatprep.subr.bf16.mxu0 %v1089
    %1413 = vmatpush2.bf16.msra.mxu0 %v1088
    %1414 = vmatprep.subr.bf16.mxu0 %v1085
    %1415 = vmatpush2.bf16.msra.mxu0 %v1084
    %1416 = vmatprep.subr.bf16.mxu0 %v1081
    %1417 = vmatpush2.bf16.msra.mxu0 %v1080
    %1418 = vmatprep.subr.bf16.mxu0 %v1077
    %1419 = vmatpush2.bf16.msra.mxu0 %v1076
    %1420 = vmatprep.subr.bf16.mxu0 %v1073
    %1421 = vmatpush2.bf16.msra.mxu0 %v1072
    %1422 = vmatprep.mubr.bf16.mxu0 %v126
    %1423 = vmatmul.mubr.bf16.gmra.mxu0 %v125
    %v1424 = vpop.f32.mrf.mxu0
    %v1425 = vadd.f32 %v1384, %v1424
    %v1426 = vpop.f32.mrf.mxu0
    %v1427 = vadd.f32 %v1386, %v1426
    %v1428 = vpop.f32.mrf.mxu0
    %v1429 = vpop.f32.mrf.mxu0
    %1430 = vdwg.mxu0
    %1431 = vmatprep.subr.bf16.mxu0 0
    %1432 = vmatpush1.bf16.msra.mxu0 0
    %1433 = vmatprep.subr.bf16.mxu0 0
    %1434 = vmatpush1.bf16.msra.mxu0 0
    %1435 = vmatprep.subr.bf16.mxu0 0
    %1436 = vmatpush1.bf16.msra.mxu0 0
    %1437 = vmatprep.subr.bf16.mxu0 0
    %1438 = vmatpush1.bf16.msra.mxu0 0
    %1439 = vmatprep.subr.bf16.mxu0 0
    %1440 = vmatpush1.bf16.msra.mxu0 0
    %1441 = vmatprep.subr.bf16.mxu0 0
    %1442 = vmatpush1.bf16.msra.mxu0 0
    %1443 = vmatprep.subr.bf16.mxu0 0
    %1444 = vmatpush1.bf16.msra.mxu0 0
    %1445 = vmatprep.subr.bf16.mxu0 %v1105
    %1446 = vmatpush1.bf16.msra.mxu0 %v1104
    %1447 = vmatprep.subr.bf16.mxu0 0
    %1448 = vmatpush2.bf16.msra.mxu0 0
    %1449 = vmatprep.subr.bf16.mxu0 0
    %1450 = vmatpush2.bf16.msra.mxu0 0
    %1451 = vmatprep.subr.bf16.mxu0 0
    %1452 = vmatpush2.bf16.msra.mxu0 0
    %1453 = vmatprep.subr.bf16.mxu0 0
    %1454 = vmatpush2.bf16.msra.mxu0 0
    %1455 = vmatprep.subr.bf16.mxu0 0
    %1456 = vmatpush2.bf16.msra.mxu0 0
    %1457 = vmatprep.subr.bf16.mxu0 0
    %1458 = vmatpush2.bf16.msra.mxu0 0
    %1459 = vmatprep.subr.bf16.mxu0 0
    %1460 = vmatpush2.bf16.msra.mxu0 0
    %1461 = vmatprep.subr.bf16.mxu0 0
    %1462 = vmatpush2.bf16.msra.mxu0 0
    %1463 = vmatprep.mubr.bf16.mxu0 0
    %1464 = vmatmul.mubr.bf16.gmra.mxu0 %v1306
    %v1465 = vpop.f32.mrf.mxu0
    %v1466 = vadd.f32 %v1425, %v1465
    %v1467 = vpop.f32.mrf.mxu0
    %v1468 = vadd.f32 %v1427, %v1467
    %v1469 = vpop.f32.mrf.mxu0
    %v1470 = vpop.f32.mrf.mxu0
    %1471 = vdwg.mxu0
    %1472 = vmatprep.subr.bf16.mxu0 %v943
    %1473 = vmatpush1.bf16.msra.mxu0 %v942
    %1474 = vmatprep.subr.bf16.mxu0 %v939
    %1475 = vmatpush1.bf16.msra.mxu0 %v938
    %1476 = vmatprep.subr.bf16.mxu0 %v935
    %1477 = vmatpush1.bf16.msra.mxu0 %v934
    %1478 = vmatprep.subr.bf16.mxu0 %v931
    %1479 = vmatpush1.bf16.msra.mxu0 %v930
    %1480 = vmatprep.subr.bf16.mxu0 %v927
    %1481 = vmatpush1.bf16.msra.mxu0 %v926
    %1482 = vmatprep.subr.bf16.mxu0 %v923
    %1483 = vmatpush1.bf16.msra.mxu0 %v922
    %1484 = vmatprep.subr.bf16.mxu0 %v919
    %1485 = vmatpush1.bf16.msra.mxu0 %v918
    %1486 = vmatprep.subr.bf16.mxu0 %v915
    %1487 = vmatpush1.bf16.msra.mxu0 %v914
    %1488 = vmatprep.subr.bf16.mxu0 %v975
    %1489 = vmatpush2.bf16.msra.mxu0 %v974
    %1490 = vmatprep.subr.bf16.mxu0 %v971
    %1491 = vmatpush2.bf16.msra.mxu0 %v970
    %1492 = vmatprep.subr.bf16.mxu0 %v967
    %1493 = vmatpush2.bf16.msra.mxu0 %v966
    %1494 = vmatprep.subr.bf16.mxu0 %v963
    %1495 = vmatpush2.bf16.msra.mxu0 %v962
    %1496 = vmatprep.subr.bf16.mxu0 %v959
    %1497 = vmatpush2.bf16.msra.mxu0 %v958
    %1498 = vmatprep.subr.bf16.mxu0 %v955
    %1499 = vmatpush2.bf16.msra.mxu0 %v954
    %1500 = vmatprep.subr.bf16.mxu0 %v951
    %1501 = vmatpush2.bf16.msra.mxu0 %v950
    %1502 = vmatprep.subr.bf16.mxu0 %v947
    %1503 = vmatpush2.bf16.msra.mxu0 %v946
    %1504 = vmatprep.mubr.bf16.mxu0 %v122
    %1505 = vmatmul.mubr.bf16.gmra.mxu0 %v121
    %v1506 = vpop.f32.mrf.mxu0
    %v1507 = vadd.f32 0.0, %v1506
    %v1508 = vpop.f32.mrf.mxu0
    %v1509 = vadd.f32 0.0, %v1508
    %v1510 = vpop.f32.mrf.mxu0
    %v1511 = vpop.f32.mrf.mxu0
    %1512 = vdwg.mxu0
    %1513 = vmatprep.subr.bf16.mxu0 %v1007
    %1514 = vmatpush1.bf16.msra.mxu0 %v1006
    %1515 = vmatprep.subr.bf16.mxu0 %v1003
    %1516 = vmatpush1.bf16.msra.mxu0 %v1002
    %1517 = vmatprep.subr.bf16.mxu0 %v999
    %1518 = vmatpush1.bf16.msra.mxu0 %v998
    %1519 = vmatprep.subr.bf16.mxu0 %v995
    %1520 = vmatpush1.bf16.msra.mxu0 %v994
    %1521 = vmatprep.subr.bf16.mxu0 %v991
    %1522 = vmatpush1.bf16.msra.mxu0 %v990
    %1523 = vmatprep.subr.bf16.mxu0 %v987
    %1524 = vmatpush1.bf16.msra.mxu0 %v986
    %1525 = vmatprep.subr.bf16.mxu0 %v983
    %1526 = vmatpush1.bf16.msra.mxu0 %v982
    %1527 = vmatprep.subr.bf16.mxu0 %v979
    %1528 = vmatpush1.bf16.msra.mxu0 %v978
    %1529 = vmatprep.subr.bf16.mxu0 %v1039
    %1530 = vmatpush2.bf16.msra.mxu0 %v1038
    %1531 = vmatprep.subr.bf16.mxu0 %v1035
    %1532 = vmatpush2.bf16.msra.mxu0 %v1034
    %1533 = vmatprep.subr.bf16.mxu0 %v1031
    %1534 = vmatpush2.bf16.msra.mxu0 %v1030
    %1535 = vmatprep.subr.bf16.mxu0 %v1027
    %1536 = vmatpush2.bf16.msra.mxu0 %v1026
    %1537 = vmatprep.subr.bf16.mxu0 %v1023
    %1538 = vmatpush2.bf16.msra.mxu0 %v1022
    %1539 = vmatprep.subr.bf16.mxu0 %v1019
    %1540 = vmatpush2.bf16.msra.mxu0 %v1018
    %1541 = vmatprep.subr.bf16.mxu0 %v1015
    %1542 = vmatpush2.bf16.msra.mxu0 %v1014
    %1543 = vmatprep.subr.bf16.mxu0 %v1011
    %1544 = vmatpush2.bf16.msra.mxu0 %v1010
    %1545 = vmatprep.mubr.bf16.mxu0 %v124
    %1546 = vmatmul.mubr.bf16.gmra.mxu0 %v123
    %v1547 = vpop.f32.mrf.mxu0
    %v1548 = vadd.f32 %v1507, %v1547
    %v1549 = vpop.f32.mrf.mxu0
    %v1550 = vadd.f32 %v1509, %v1549
    %v1551 = vpop.f32.mrf.mxu0
    %v1552 = vpop.f32.mrf.mxu0
    %1553 = vdwg.mxu0
    %1554 = vmatprep.subr.bf16.mxu0 %v1071
    %1555 = vmatpush1.bf16.msra.mxu0 %v1070
    %1556 = vmatprep.subr.bf16.mxu0 %v1067
    %1557 = vmatpush1.bf16.msra.mxu0 %v1066
    %1558 = vmatprep.subr.bf16.mxu0 %v1063
    %1559 = vmatpush1.bf16.msra.mxu0 %v1062
    %1560 = vmatprep.subr.bf16.mxu0 %v1059
    %1561 = vmatpush1.bf16.msra.mxu0 %v1058
    %1562 = vmatprep.subr.bf16.mxu0 %v1055
    %1563 = vmatpush1.bf16.msra.mxu0 %v1054
    %1564 = vmatprep.subr.bf16.mxu0 %v1051
    %1565 = vmatpush1.bf16.msra.mxu0 %v1050
    %1566 = vmatprep.subr.bf16.mxu0 %v1047
    %1567 = vmatpush1.bf16.msra.mxu0 %v1046
    %1568 = vmatprep.subr.bf16.mxu0 %v1043
    %1569 = vmatpush1.bf16.msra.mxu0 %v1042
    %1570 = vmatprep.subr.bf16.mxu0 %v1103
    %1571 = vmatpush2.bf16.msra.mxu0 %v1102
    %1572 = vmatprep.subr.bf16.mxu0 %v1099
    %1573 = vmatpush2.bf16.msra.mxu0 %v1098
    %1574 = vmatprep.subr.bf16.mxu0 %v1095
    %1575 = vmatpush2.bf16.msra.mxu0 %v1094
    %1576 = vmatprep.subr.bf16.mxu0 %v1091
    %1577 = vmatpush2.bf16.msra.mxu0 %v1090
    %1578 = vmatprep.subr.bf16.mxu0 %v1087
    %1579 = vmatpush2.bf16.msra.mxu0 %v1086
    %1580 = vmatprep.subr.bf16.mxu0 %v1083
    %1581 = vmatpush2.bf16.msra.mxu0 %v1082
    %1582 = vmatprep.subr.bf16.mxu0 %v1079
    %1583 = vmatpush2.bf16.msra.mxu0 %v1078
    %1584 = vmatprep.subr.bf16.mxu0 %v1075
    %1585 = vmatpush2.bf16.msra.mxu0 %v1074
    %1586 = vmatprep.mubr.bf16.mxu0 %v126
    %1587 = vmatmul.mubr.bf16.gmra.mxu0 %v125
    %v1588 = vpop.f32.mrf.mxu0
    %v1589 = vadd.f32 %v1548, %v1588
    %v1590 = vpop.f32.mrf.mxu0
    %v1591 = vadd.f32 %v1550, %v1590
    %v1592 = vpop.f32.mrf.mxu0
    %v1593 = vpop.f32.mrf.mxu0
    %1594 = vdwg.mxu0
    %1595 = vmatprep.subr.bf16.mxu0 0
    %1596 = vmatpush1.bf16.msra.mxu0 0
    %1597 = vmatprep.subr.bf16.mxu0 0
    %1598 = vmatpush1.bf16.msra.mxu0 0
    %1599 = vmatprep.subr.bf16.mxu0 0
    %1600 = vmatpush1.bf16.msra.mxu0 0
    %1601 = vmatprep.subr.bf16.mxu0 0
    %1602 = vmatpush1.bf16.msra.mxu0 0
    %1603 = vmatprep.subr.bf16.mxu0 0
    %1604 = vmatpush1.bf16.msra.mxu0 0
    %1605 = vmatprep.subr.bf16.mxu0 0
    %1606 = vmatpush1.bf16.msra.mxu0 0
    %1607 = vmatprep.subr.bf16.mxu0 0
    %1608 = vmatpush1.bf16.msra.mxu0 0
    %1609 = vmatprep.subr.bf16.mxu0 %v1107
    %1610 = vmatpush1.bf16.msra.mxu0 %v1106
    %1611 = vmatprep.subr.bf16.mxu0 0
    %1612 = vmatpush2.bf16.msra.mxu0 0
    %1613 = vmatprep.subr.bf16.mxu0 0
    %1614 = vmatpush2.bf16.msra.mxu0 0
    %1615 = vmatprep.subr.bf16.mxu0 0
    %1616 = vmatpush2.bf16.msra.mxu0 0
    %1617 = vmatprep.subr.bf16.mxu0 0
    %1618 = vmatpush2.bf16.msra.mxu0 0
    %1619 = vmatprep.subr.bf16.mxu0 0
    %1620 = vmatpush2.bf16.msra.mxu0 0
    %1621 = vmatprep.subr.bf16.mxu0 0
    %1622 = vmatpush2.bf16.msra.mxu0 0
    %1623 = vmatprep.subr.bf16.mxu0 0
    %1624 = vmatpush2.bf16.msra.mxu0 0
    %1625 = vmatprep.subr.bf16.mxu0 0
    %1626 = vmatpush2.bf16.msra.mxu0 0
    %1627 = vmatprep.mubr.bf16.mxu0 0
    %1628 = vmatmul.mubr.bf16.gmra.mxu0 %v1306
    %v1629 = vpop.f32.mrf.mxu0
    %v1630 = vadd.f32 %v1589, %v1629
    %v1631 = vpop.f32.mrf.mxu0
    %v1632 = vadd.f32 %v1591, %v1631
    %v1633 = vpop.f32.mrf.mxu0
    %v1634 = vpop.f32.mrf.mxu0
    %1635 = vdwg.mxu0
    %v1636 = vld [vmem:[%s3] sm:$0xf]
    %v1637 = vld [vmem:[#allocation8] sm:$0xf]
    %vm1638 = vcmask 64512
    %v1640 = vsel %vm1638, %v113, 0
    %1642 = vmatprep.subr.mxu0 0.0
    %1643 = vmatpush1.msra.mxu0 0.0
    %1644 = vmatprep.subr.mxu0 0.0
    %1645 = vmatpush1.msra.mxu0 0.0
    %1646 = vmatprep.subr.mxu0 0.0
    %1647 = vmatpush1.msra.mxu0 0.0
    %1648 = vmatprep.subr.mxu0 0.0
    %1649 = vmatpush1.msra.mxu0 0.0
    %1650 = vmatprep.subr.mxu0 0.0
    %1651 = vmatpush1.msra.mxu0 0.0
    %1652 = vmatprep.subr.mxu0 0.0
    %1653 = vmatpush1.msra.mxu0 0.0
    %1654 = vmatprep.subr.mxu0 0.0
    %1655 = vmatpush1.msra.mxu0 0.0
    %1656 = vmatprep.subr.mxu0 0.0
    %1657 = vmatpush1.msra.mxu0 0.0
    %1658 = vmatprep.subr.mxu0 0.0
    %1659 = vmatpush1.msra.mxu0 0.0
    %1660 = vmatprep.subr.mxu0 0.0
    %1661 = vmatpush1.msra.mxu0 0.0
    %1662 = vmatprep.subr.mxu0 0.0
    %1663 = vmatpush1.msra.mxu0 0.0
    %1664 = vmatprep.subr.mxu0 0.0
    %1665 = vmatpush1.msra.mxu0 0.0
    %1666 = vmatprep.subr.mxu0 0.0
    %1667 = vmatpush1.msra.mxu0 0.0
    %1668 = vmatprep.subr.mxu0 0.0
    %1669 = vmatpush1.msra.mxu0 0.0
    %1670 = vmatprep.subr.mxu0 0.0
    %1671 = vmatpush1.msra.mxu0 0.0
    %1672 = vmatprep.subr.mxu0 %v1468
    %1673 = vmatpush1.msra.mxu0 %v1466
    %1674 = vmatprep.subr.mxu0 0.0
    %1675 = vmatpush2.msra.mxu0 0.0
    %1676 = vmatprep.subr.mxu0 0.0
    %1677 = vmatpush2.msra.mxu0 0.0
    %1678 = vmatprep.subr.mxu0 0.0
    %1679 = vmatpush2.msra.mxu0 0.0
    %1680 = vmatprep.subr.mxu0 0.0
    %1681 = vmatpush2.msra.mxu0 0.0
    %1682 = vmatprep.subr.mxu0 0.0
    %1683 = vmatpush2.msra.mxu0 0.0
    %1684 = vmatprep.subr.mxu0 0.0
    %1685 = vmatpush2.msra.mxu0 0.0
    %1686 = vmatprep.subr.mxu0 0.0
    %1687 = vmatpush2.msra.mxu0 0.0
    %1688 = vmatprep.subr.mxu0 0.0
    %1689 = vmatpush2.msra.mxu0 0.0
    %1690 = vmatprep.subr.mxu0 0.0
    %1691 = vmatpush2.msra.mxu0 0.0
    %1692 = vmatprep.subr.mxu0 0.0
    %1693 = vmatpush2.msra.mxu0 0.0
    %1694 = vmatprep.subr.mxu0 0.0
    %1695 = vmatpush2.msra.mxu0 0.0
    %1696 = vmatprep.subr.mxu0 0.0
    %1697 = vmatpush2.msra.mxu0 0.0
    %1698 = vmatprep.subr.mxu0 0.0
    %1699 = vmatpush2.msra.mxu0 0.0
    %1700 = vmatprep.subr.mxu0 0.0
    %1701 = vmatpush2.msra.mxu0 0.0
    %1702 = vmatprep.subr.mxu0 0.0
    %1703 = vmatpush2.msra.mxu0 0.0
    %1704 = vmatprep.subr.mxu0 0.0
    %1705 = vmatpush2.msra.mxu0 0.0
    %1706 = vmatprep.mubr.f32.mxu0 0.0
    %1707 = vmatmul.mubr.f32.gmra.mxu0 %v1640
    %v1708 = vpop.f32.mrf.mxu0
    %v1709 = vadd.f32 0.0, %v1708
    %v1710 = vpop.f32.mrf.mxu0
    %v1711 = vadd.f32 0.0, %v1710
    %1712 = vdwg.mxu0
    %1713 = vmatprep.subr.mxu0 0.0
    %1714 = vmatpush1.msra.mxu0 0.0
    %1715 = vmatprep.subr.mxu0 0.0
    %1716 = vmatpush1.msra.mxu0 0.0
    %1717 = vmatprep.subr.mxu0 0.0
    %1718 = vmatpush1.msra.mxu0 0.0
    %1719 = vmatprep.subr.mxu0 0.0
    %1720 = vmatpush1.msra.mxu0 0.0
    %1721 = vmatprep.subr.mxu0 0.0
    %1722 = vmatpush1.msra.mxu0 0.0
    %1723 = vmatprep.subr.mxu0 0.0
    %1724 = vmatpush1.msra.mxu0 0.0
    %1725 = vmatprep.subr.mxu0 0.0
    %1726 = vmatpush1.msra.mxu0 0.0
    %1727 = vmatprep.subr.mxu0 0.0
    %1728 = vmatpush1.msra.mxu0 0.0
    %1729 = vmatprep.subr.mxu0 0.0
    %1730 = vmatpush1.msra.mxu0 0.0
    %1731 = vmatprep.subr.mxu0 0.0
    %1732 = vmatpush1.msra.mxu0 0.0
    %1733 = vmatprep.subr.mxu0 0.0
    %1734 = vmatpush1.msra.mxu0 0.0
    %1735 = vmatprep.subr.mxu0 0.0
    %1736 = vmatpush1.msra.mxu0 0.0
    %1737 = vmatprep.subr.mxu0 0.0
    %1738 = vmatpush1.msra.mxu0 0.0
    %1739 = vmatprep.subr.mxu0 0.0
    %1740 = vmatpush1.msra.mxu0 0.0
    %1741 = vmatprep.subr.mxu0 0.0
    %1742 = vmatpush1.msra.mxu0 0.0
    %1743 = vmatprep.subr.mxu0 %v1632
    %1744 = vmatpush1.msra.mxu0 %v1630
    %1745 = vmatprep.subr.mxu0 0.0
    %1746 = vmatpush2.msra.mxu0 0.0
    %1747 = vmatprep.subr.mxu0 0.0
    %1748 = vmatpush2.msra.mxu0 0.0
    %1749 = vmatprep.subr.mxu0 0.0
    %1750 = vmatpush2.msra.mxu0 0.0
    %1751 = vmatprep.subr.mxu0 0.0
    %1752 = vmatpush2.msra.mxu0 0.0
    %1753 = vmatprep.subr.mxu0 0.0
    %1754 = vmatpush2.msra.mxu0 0.0
    %1755 = vmatprep.subr.mxu0 0.0
    %1756 = vmatpush2.msra.mxu0 0.0
    %1757 = vmatprep.subr.mxu0 0.0
    %1758 = vmatpush2.msra.mxu0 0.0
    %1759 = vmatprep.subr.mxu0 0.0
    %1760 = vmatpush2.msra.mxu0 0.0
    %1761 = vmatprep.subr.mxu0 0.0
    %1762 = vmatpush2.msra.mxu0 0.0
    %1763 = vmatprep.subr.mxu0 0.0
    %1764 = vmatpush2.msra.mxu0 0.0
    %1765 = vmatprep.subr.mxu0 0.0
    %1766 = vmatpush2.msra.mxu0 0.0
    %1767 = vmatprep.subr.mxu0 0.0
    %1768 = vmatpush2.msra.mxu0 0.0
    %1769 = vmatprep.subr.mxu0 0.0
    %1770 = vmatpush2.msra.mxu0 0.0
    %1771 = vmatprep.subr.mxu0 0.0
    %1772 = vmatpush2.msra.mxu0 0.0
    %1773 = vmatprep.subr.mxu0 0.0
    %1774 = vmatpush2.msra.mxu0 0.0
    %1775 = vmatprep.subr.mxu0 0.0
    %1776 = vmatpush2.msra.mxu0 0.0
    %1777 = vmatprep.mubr.f32.mxu0 0.0
    %1778 = vmatmul.mubr.f32.gmra.mxu0 %v1640
    %v1779 = vpop.f32.mrf.mxu0
    %v1780 = vadd.f32 0.0, %v1779
    %v1781 = vpop.f32.mrf.mxu0
    %v1782 = vadd.f32 0.0, %v1781
    %1783 = vdwg.mxu0
    %v1784 = vmul.f32 %v1709, 0.5
    %v1785 = vmul.f32 %v1711, 0.5
    %v1786 = vmul.f32 %v1780, 0.5
    %v1787 = vmul.f32 %v1782, 0.5
    %v1788 = vlaneseq
    %v1789 = vshrl.u32 %v1788, 7
    %v1790 = vsub.s32 0, %v1789
    %v1791 = vrot.slane %v1784, %v1790
    %v1792 = vlaneseq
    %v1793 = vshrl.u32 %v1792, 7
    %v1794 = vsub.s32 0, %v1793
    %v1795 = vrot.slane %v1785, %v1794
    %v1796 = vlaneseq
    %v1797 = vshrl.u32 %v1796, 7
    %v1798 = vsub.s32 0, %v1797
    %v1799 = vrot.slane %v1786, %v1798
    %v1800 = vlaneseq
    %v1801 = vshrl.u32 %v1800, 7
    %v1802 = vsub.s32 0, %v1801
    %v1803 = vrot.slane %v1787, %v1802
    %v1804 = vsub.f32 %v1466, %v1791
    %v1805 = vsub.f32 %v1468, %v1795
    %v1806 = vsub.f32 %v1630, %v1799
    %v1807 = vsub.f32 %v1632, %v1803
    %v1808 = vmul.f32 %v1804, %v1804
    %v1809 = vmul.f32 %v1805, %v1805
    %v1810 = vmul.f32 %v1806, %v1806
    %v1811 = vmul.f32 %v1807, %v1807
    %1812 = vmatprep.subr.mxu0 0.0
    %1813 = vmatpush1.msra.mxu0 0.0
    %1814 = vmatprep.subr.mxu0 0.0
    %1815 = vmatpush1.msra.mxu0 0.0
    %1816 = vmatprep.subr.mxu0 0.0
    %1817 = vmatpush1.msra.mxu0 0.0
    %1818 = vmatprep.subr.mxu0 0.0
    %1819 = vmatpush1.msra.mxu0 0.0
    %1820 = vmatprep.subr.mxu0 0.0
    %1821 = vmatpush1.msra.mxu0 0.0
    %1822 = vmatprep.subr.mxu0 0.0
    %1823 = vmatpush1.msra.mxu0 0.0
    %1824 = vmatprep.subr.mxu0 0.0
    %1825 = vmatpush1.msra.mxu0 0.0
    %1826 = vmatprep.subr.mxu0 0.0
    %1827 = vmatpush1.msra.mxu0 0.0
    %1828 = vmatprep.subr.mxu0 0.0
    %1829 = vmatpush1.msra.mxu0 0.0
    %1830 = vmatprep.subr.mxu0 0.0
    %1831 = vmatpush1.msra.mxu0 0.0
    %1832 = vmatprep.subr.mxu0 0.0
    %1833 = vmatpush1.msra.mxu0 0.0
    %1834 = vmatprep.subr.mxu0 0.0
    %1835 = vmatpush1.msra.mxu0 0.0
    %1836 = vmatprep.subr.mxu0 0.0
    %1837 = vmatpush1.msra.mxu0 0.0
    %1838 = vmatprep.subr.mxu0 0.0
    %1839 = vmatpush1.msra.mxu0 0.0
    %1840 = vmatprep.subr.mxu0 0.0
    %1841 = vmatpush1.msra.mxu0 0.0
    %1842 = vmatprep.subr.mxu0 %v1809
    %1843 = vmatpush1.msra.mxu0 %v1808
    %1844 = vmatprep.subr.mxu0 0.0
    %1845 = vmatpush2.msra.mxu0 0.0
    %1846 = vmatprep.subr.mxu0 0.0
    %1847 = vmatpush2.msra.mxu0 0.0
    %1848 = vmatprep.subr.mxu0 0.0
    %1849 = vmatpush2.msra.mxu0 0.0
    %1850 = vmatprep.subr.mxu0 0.0
    %1851 = vmatpush2.msra.mxu0 0.0
    %1852 = vmatprep.subr.mxu0 0.0
    %1853 = vmatpush2.msra.mxu0 0.0
    %1854 = vmatprep.subr.mxu0 0.0
    %1855 = vmatpush2.msra.mxu0 0.0
    %1856 = vmatprep.subr.mxu0 0.0
    %1857 = vmatpush2.msra.mxu0 0.0
    %1858 = vmatprep.subr.mxu0 0.0
    %1859 = vmatpush2.msra.mxu0 0.0
    %1860 = vmatprep.subr.mxu0 0.0
    %1861 = vmatpush2.msra.mxu0 0.0
    %1862 = vmatprep.subr.mxu0 0.0
    %1863 = vmatpush2.msra.mxu0 0.0
    %1864 = vmatprep.subr.mxu0 0.0
    %1865 = vmatpush2.msra.mxu0 0.0
    %1866 = vmatprep.subr.mxu0 0.0
    %1867 = vmatpush2.msra.mxu0 0.0
    %1868 = vmatprep.subr.mxu0 0.0
    %1869 = vmatpush2.msra.mxu0 0.0
    %1870 = vmatprep.subr.mxu0 0.0
    %1871 = vmatpush2.msra.mxu0 0.0
    %1872 = vmatprep.subr.mxu0 0.0
    %1873 = vmatpush2.msra.mxu0 0.0
    %1874 = vmatprep.subr.mxu0 0.0
    %1875 = vmatpush2.msra.mxu0 0.0
    %1876 = vmatprep.mubr.f32.mxu0 0.0
    %1877 = vmatmul.mubr.f32.gmra.mxu0 %v1640
    %v1878 = vpop.f32.mrf.mxu0
    %v1879 = vadd.f32 0.0, %v1878
    %v1880 = vpop.f32.mrf.mxu0
    %v1881 = vadd.f32 0.0, %v1880
    %1882 = vdwg.mxu0
    %1883 = vmatprep.subr.mxu0 0.0
    %1884 = vmatpush1.msra.mxu0 0.0
    %1885 = vmatprep.subr.mxu0 0.0
    %1886 = vmatpush1.msra.mxu0 0.0
    %1887 = vmatprep.subr.mxu0 0.0
    %1888 = vmatpush1.msra.mxu0 0.0
    %1889 = vmatprep.subr.mxu0 0.0
    %1890 = vmatpush1.msra.mxu0 0.0
    %1891 = vmatprep.subr.mxu0 0.0
    %1892 = vmatpush1.msra.mxu0 0.0
    %1893 = vmatprep.subr.mxu0 0.0
    %1894 = vmatpush1.msra.mxu0 0.0
    %1895 = vmatprep.subr.mxu0 0.0
    %1896 = vmatpush1.msra.mxu0 0.0
    %1897 = vmatprep.subr.mxu0 0.0
    %1898 = vmatpush1.msra.mxu0 0.0
    %1899 = vmatprep.subr.mxu0 0.0
    %1900 = vmatpush1.msra.mxu0 0.0
    %1901 = vmatprep.subr.mxu0 0.0
    %1902 = vmatpush1.msra.mxu0 0.0
    %1903 = vmatprep.subr.mxu0 0.0
    %1904 = vmatpush1.msra.mxu0 0.0
    %1905 = vmatprep.subr.mxu0 0.0
    %1906 = vmatpush1.msra.mxu0 0.0
    %1907 = vmatprep.subr.mxu0 0.0
    %1908 = vmatpush1.msra.mxu0 0.0
    %1909 = vmatprep.subr.mxu0 0.0
    %1910 = vmatpush1.msra.mxu0 0.0
    %1911 = vmatprep.subr.mxu0 0.0
    %1912 = vmatpush1.msra.mxu0 0.0
    %1913 = vmatprep.subr.mxu0 %v1811
    %1914 = vmatpush1.msra.mxu0 %v1810
    %1915 = vmatprep.subr.mxu0 0.0
    %1916 = vmatpush2.msra.mxu0 0.0
    %1917 = vmatprep.subr.mxu0 0.0
    %1918 = vmatpush2.msra.mxu0 0.0
    %1919 = vmatprep.subr.mxu0 0.0
    %1920 = vmatpush2.msra.mxu0 0.0
    %1921 = vmatprep.subr.mxu0 0.0
    %1922 = vmatpush2.msra.mxu0 0.0
    %1923 = vmatprep.subr.mxu0 0.0
    %1924 = vmatpush2.msra.mxu0 0.0
    %1925 = vmatprep.subr.mxu0 0.0
    %1926 = vmatpush2.msra.mxu0 0.0
    %1927 = vmatprep.subr.mxu0 0.0
    %1928 = vmatpush2.msra.mxu0 0.0
    %1929 = vmatprep.subr.mxu0 0.0
    %1930 = vmatpush2.msra.mxu0 0.0
    %1931 = vmatprep.subr.mxu0 0.0
    %1932 = vmatpush2.msra.mxu0 0.0
    %1933 = vmatprep.subr.mxu0 0.0
    %1934 = vmatpush2.msra.mxu0 0.0
    %1935 = vmatprep.subr.mxu0 0.0
    %1936 = vmatpush2.msra.mxu0 0.0
    %1937 = vmatprep.subr.mxu0 0.0
    %1938 = vmatpush2.msra.mxu0 0.0
    %1939 = vmatprep.subr.mxu0 0.0
    %1940 = vmatpush2.msra.mxu0 0.0
    %1941 = vmatprep.subr.mxu0 0.0
    %1942 = vmatpush2.msra.mxu0 0.0
    %1943 = vmatprep.subr.mxu0 0.0
    %1944 = vmatpush2.msra.mxu0 0.0
    %1945 = vmatprep.subr.mxu0 0.0
    %1946 = vmatpush2.msra.mxu0 0.0
    %1947 = vmatprep.mubr.f32.mxu0 0.0
    %1948 = vmatmul.mubr.f32.gmra.mxu0 %v1640
    %v1949 = vpop.f32.mrf.mxu0
    %v1950 = vadd.f32 0.0, %v1949
    %v1951 = vpop.f32.mrf.mxu0
    %v1952 = vadd.f32 0.0, %v1951
    %1953 = vdwg.mxu0
    %v1954 = vmul.f32 %v1879, 0.5
    %v1955 = vmul.f32 %v1881, 0.5
    %v1956 = vmul.f32 %v1950, 0.5
    %v1957 = vmul.f32 %v1952, 0.5
    %v1958 = vadd.f32 %v1954, 1e-05
    %v1959 = vadd.f32 %v1955, 1e-05
    %v1960 = vadd.f32 %v1956, 1e-05
    %v1961 = vadd.f32 %v1957, 1e-05
    %v1962 = vrsqrt.pop %v1958
    %v1963 = vrsqrt.pop %v1959
    %v1964 = vrsqrt.pop %v1960
    %v1965 = vrsqrt.pop %v1961
    %v1970 = vcombine.low %v1962, %v1963
    %v1971 = vcombine.low %v1964, %v1965
    %v1973 = vunpack.c.l.s4 1966171168
    %v1974 = vunpack.c.0.s8 %v1973
    %v1975 = vlaneseq
    %v1976 = vshrl.u32 %v1975, 7
    %v1977 = vsub.s32 %v1974, %v1976
    %v1978 = vrot.slane %v1970, %v1977
    %v1980 = vunpack.c.l.s4 1966171168
    %v1981 = vunpack.c.0.s8 %v1980
    %v1982 = vlaneseq
    %v1983 = vshrl.u32 %v1982, 7
    %v1984 = vsub.s32 %v1981, %v1983
    %v1985 = vrot.slane %v1971, %v1984
    %v1986 = vcombine.low %v1978, %v1985
    %v1988 = vunpack.c.l.s4 1966171168
    %v1989 = vunpack.c.0.s8 %v1988
    %v1990 = vlaneseq
    %v1991 = vshrl.u32 %v1990, 7
    %v1992 = vsub.s32 %v1989, %v1991
    %v1993 = vrot.slane %v1986, %v1992
    %v1995 = vmul.f32 %v1636, %v1993
    %v1997 = vlaneseq
    %v1998 = vshrl.u32 %v1997, 7
    %v1999 = vsub.s32 0, %v1998
    %v2000 = vrot.slane %v1995, %v1999
    %v2001 = vlaneseq
    %v2002 = vshrl.u32 %v2001, 7
    %v2003 = vsub.s32 1, %v2002
    %v2004 = vrot.slane %v1995, %v2003
    %v2005 = vlaneseq
    %v2006 = vshrl.u32 %v2005, 7
    %v2007 = vsub.s32 2, %v2006
    %v2008 = vrot.slane %v1995, %v2007
    %v2009 = vlaneseq
    %v2010 = vshrl.u32 %v2009, 7
    %v2011 = vsub.s32 3, %v2010
    %v2012 = vrot.slane %v1995, %v2011
    %v2017 = vmul.f32 %v1804, %v2000
    %v2018 = vmul.f32 %v1805, %v2004
    %v2019 = vmul.f32 %v1806, %v2008
    %v2020 = vmul.f32 %v1807, %v2012
    %v2022 = vlaneseq
    %v2023 = vshrl.u32 %v2022, 7
    %v2024 = vsub.s32 0, %v2023
    %v2025 = vrot.slane %v1637, %v2024
    %v2026 = vlaneseq
    %v2027 = vshrl.u32 %v2026, 7
    %v2028 = vsub.s32 1, %v2027
    %v2029 = vrot.slane %v1637, %v2028
    %v2030 = vlaneseq
    %v2031 = vshrl.u32 %v2030, 7
    %v2032 = vsub.s32 2, %v2031
    %v2033 = vrot.slane %v1637, %v2032
    %v2034 = vlaneseq
    %v2035 = vshrl.u32 %v2034, 7
    %v2036 = vsub.s32 3, %v2035
    %v2037 = vrot.slane %v1637, %v2036
    %v2042 = vadd.f32 %v2017, %v2025
    %v2043 = vadd.f32 %v2018, %v2029
    %v2044 = vadd.f32 %v2019, %v2033
    %v2045 = vadd.f32 %v2020, %v2037
    %v2046 = vmax.f32 %v2042, 0.0
    %v2047 = vmax.f32 %v2043, 0.0
    %v2048 = vmax.f32 %v2044, 0.0
    %v2049 = vmax.f32 %v2045, 0.0
    %v2050 = vpack.c.bf16 %v2046, %v2046
    %v2051 = vpack.c.bf16 %v2047, %v2047
    %v2052 = vpack.c.bf16 %v2048, %v2048
    %v2053 = vpack.c.bf16 %v2049, %v2049
    %v2054 = vld [vmem:[#allocation10] sm:$0xff]
    %v2055 = vld [vmem:[#allocation10 + $0x8] sm:$0xf]
    %v2056 = vld [vmem:[#allocation10 + $0xc] sm:$0xff]
    %v2057 = vld [vmem:[#allocation10 + $0x14] sm:$0xf]
    %v2058 = vld [vmem:[#allocation10 + $0x18] sm:$0xff]
    %v2059 = vld [vmem:[#allocation10 + $0x20] sm:$0xf]
    %v2060 = vld [vmem:[#allocation10 + $0x24] sm:$0xff]
    %v2061 = vld [vmem:[#allocation10 + $0x2c] sm:$0xf]
    %v2062 = vld [vmem:[#allocation10 + $0x30] sm:$0xff]
    %v2063 = vld [vmem:[#allocation10 + $0x38] sm:$0xf]
    %v2064 = vld [vmem:[#allocation10 + $0x3c] sm:$0xff]
    %v2065 = vld [vmem:[#allocation10 + $0x44] sm:$0xf]
    %v2066 = vld [vmem:[#allocation10 + $0x48] sm:$0xff]
    %v2067 = vld [vmem:[#allocation10 + $0x50] sm:$0xf]
    %v2068 = vld [vmem:[#allocation10 + $0x54] sm:$0xff]
    %v2069 = vld [vmem:[#allocation10 + $0x5c] sm:$0xf]
    %v2070 = vld [vmem:[#allocation10 + $0x60] sm:$0xff]
    %v2071 = vld [vmem:[#allocation10 + $0x68] sm:$0xf]
    %v2072 = vld [vmem:[#allocation10 + $0x6c] sm:$0xff]
    %v2073 = vld [vmem:[#allocation10 + $0x74] sm:$0xf]
    %v2074 = vld [vmem:[#allocation10 + $0x78] sm:$0xff]
    %v2075 = vld [vmem:[#allocation10 + $0x80] sm:$0xf]
    %v2076 = vld [vmem:[#allocation10 + $0x84] sm:$0xff]
    %v2077 = vld [vmem:[#allocation10 + $0x8c] sm:$0xf]
    %v2078 = vld [vmem:[#allocation10 + $0x90] sm:$0xff]
    %v2079 = vld [vmem:[#allocation10 + $0x98] sm:$0xf]
    %v2080 = vld [vmem:[#allocation10 + $0x9c] sm:$0xff]
    %v2081 = vld [vmem:[#allocation10 + $0xa4] sm:$0xf]
    %v2082 = vld [vmem:[#allocation10 + $0xa8] sm:$0xff]
    %v2083 = vld [vmem:[#allocation10 + $0xb0] sm:$0xf]
    %v2084 = vld [vmem:[#allocation10 + $0xb4] sm:$0xff]
    %v2085 = vld [vmem:[#allocation10 + $0xbc] sm:$0xf]
    %v2086 = vld [vmem:[#allocation10 + $0xc0] sm:$0xff]
    %v2087 = vld [vmem:[#allocation10 + $0xc8] sm:$0xf]
    %v2088 = vld [vmem:[#allocation10 + $0xcc] sm:$0xff]
    %v2089 = vld [vmem:[#allocation10 + $0xd4] sm:$0xf]
    %v2090 = vld [vmem:[#allocation10 + $0xd8] sm:$0xff]
    %v2091 = vld [vmem:[#allocation10 + $0xe0] sm:$0xf]
    %v2092 = vld [vmem:[#allocation10 + $0xe4] sm:$0xff]
    %v2093 = vld [vmem:[#allocation10 + $0xec] sm:$0xf]
    %v2094 = vld [vmem:[#allocation10 + $0xf0] sm:$0xff]
    %v2095 = vld [vmem:[#allocation10 + $0xf8] sm:$0xf]
    %v2096 = vld [vmem:[#allocation10 + $0xfc] sm:$0xff]
    %v2097 = vld [vmem:[#allocation10 + $0x104] sm:$0xf]
    %v2098 = vld [vmem:[#allocation10 + $0x108] sm:$0xff]
    %v2099 = vld [vmem:[#allocation10 + $0x110] sm:$0xf]
    %v2100 = vld [vmem:[#allocation10 + $0x114] sm:$0xff]
    %v2101 = vld [vmem:[#allocation10 + $0x11c] sm:$0xf]
    %v2102 = vld [vmem:[#allocation10 + $0x120] sm:$0xff]
    %v2103 = vld [vmem:[#allocation10 + $0x128] sm:$0xf]
    %v2104 = vld [vmem:[#allocation10 + $0x12c] sm:$0xff]
    %v2105 = vld [vmem:[#allocation10 + $0x134] sm:$0xf]
    %v2106 = vld [vmem:[#allocation10 + $0x138] sm:$0xff]
    %v2107 = vld [vmem:[#allocation10 + $0x140] sm:$0xf]
    %v2108 = vld [vmem:[#allocation10 + $0x144] sm:$0xff]
    %v2109 = vld [vmem:[#allocation10 + $0x14c] sm:$0xf]
    %v2110 = vld [vmem:[#allocation10 + $0x150] sm:$0xff]
    %v2111 = vld [vmem:[#allocation10 + $0x158] sm:$0xf]
    %v2112 = vld [vmem:[#allocation10 + $0x15c] sm:$0xff]
    %v2113 = vld [vmem:[#allocation10 + $0x164] sm:$0xf]
    %v2114 = vld [vmem:[#allocation10 + $0x168] sm:$0xff]
    %v2115 = vld [vmem:[#allocation10 + $0x170] sm:$0xf]
    %v2116 = vld [vmem:[#allocation10 + $0x174] sm:$0xff]
    %v2117 = vld [vmem:[#allocation10 + $0x17c] sm:$0xf]
    %v2118 = vld [vmem:[#allocation10 + $0x180] sm:$0xff]
    %v2119 = vld [vmem:[#allocation10 + $0x188] sm:$0xf]
    %v2120 = vld [vmem:[#allocation10 + $0x18c] sm:$0xff]
    %v2121 = vld [vmem:[#allocation10 + $0x194] sm:$0xf]
    %v2122 = vld [vmem:[#allocation10 + $0x198] sm:$0xff]
    %v2123 = vld [vmem:[#allocation10 + $0x1a0] sm:$0xf]
    %v2124 = vld [vmem:[#allocation10 + $0x1a4] sm:$0xff]
    %v2125 = vld [vmem:[#allocation10 + $0x1ac] sm:$0xf]
    %v2126 = vld [vmem:[#allocation10 + $0x1b0] sm:$0xff]
    %v2127 = vld [vmem:[#allocation10 + $0x1b8] sm:$0xf]
    %v2128 = vld [vmem:[#allocation10 + $0x1bc] sm:$0xff]
    %v2129 = vld [vmem:[#allocation10 + $0x1c4] sm:$0xf]
    %v2130 = vld [vmem:[#allocation10 + $0x1c8] sm:$0xff]
    %v2131 = vld [vmem:[#allocation10 + $0x1d0] sm:$0xf]
    %v2132 = vld [vmem:[#allocation10 + $0x1d4] sm:$0xff]
    %v2133 = vld [vmem:[#allocation10 + $0x1dc] sm:$0xf]
    %v2134 = vld [vmem:[#allocation10 + $0x1e0] sm:$0xff]
    %v2135 = vld [vmem:[#allocation10 + $0x1e8] sm:$0xf]
    %v2136 = vld [vmem:[#allocation10 + $0x1ec] sm:$0xff]
    %v2137 = vld [vmem:[#allocation10 + $0x1f4] sm:$0xf]
    %v2138 = vld [vmem:[#allocation10 + $0x1f8] sm:$0xff]
    %v2139 = vld [vmem:[#allocation10 + $0x200] sm:$0xf]
    %v2140 = vld [vmem:[#allocation10 + $0x204] sm:$0xff]
    %v2141 = vld [vmem:[#allocation10 + $0x20c] sm:$0xf]
    %v2142 = vld [vmem:[#allocation10 + $0x210] sm:$0xff]
    %v2143 = vld [vmem:[#allocation10 + $0x218] sm:$0xf]
    %v2144 = vld [vmem:[#allocation10 + $0x21c] sm:$0xff]
    %v2145 = vld [vmem:[#allocation10 + $0x224] sm:$0xf]
    %v2146 = vld [vmem:[#allocation10 + $0x228] sm:$0xff]
    %v2147 = vld [vmem:[#allocation10 + $0x230] sm:$0xf]
    %v2148 = vld [vmem:[#allocation10 + $0x234] sm:$0xff]
    %v2149 = vld [vmem:[#allocation10 + $0x23c] sm:$0xf]
    %v2150 = vld [vmem:[#allocation10 + $0x240] sm:$0xff]
    %v2151 = vld [vmem:[#allocation10 + $0x248] sm:$0xf]
    %v2152 = vld [vmem:[#allocation10 + $0x24c] sm:$0xff]
    %v2153 = vld [vmem:[#allocation10 + $0x254] sm:$0xf]
    %v2154 = vld [vmem:[#allocation10 + $0x258] sm:$0xff]
    %v2155 = vld [vmem:[#allocation10 + $0x260] sm:$0xf]
    %v2156 = vld [vmem:[#allocation10 + $0x264] sm:$0xff]
    %v2157 = vld [vmem:[#allocation10 + $0x26c] sm:$0xf]
    %v2158 = vld [vmem:[#allocation10 + $0x270] sm:$0xff]
    %v2159 = vld [vmem:[#allocation10 + $0x278] sm:$0xf]
    %v2160 = vld [vmem:[#allocation10 + $0x27c] sm:$0xff]
    %v2161 = vld [vmem:[#allocation10 + $0x284] sm:$0xf]
    %v2162 = vld [vmem:[#allocation10 + $0x288] sm:$0xff]
    %v2163 = vld [vmem:[#allocation10 + $0x290] sm:$0xf]
    %v2164 = vld [vmem:[#allocation10 + $0x294] sm:$0xff]
    %v2165 = vld [vmem:[#allocation10 + $0x29c] sm:$0xf]
    %v2166 = vld [vmem:[#allocation10 + $0x2a0] sm:$0xff]
    %v2167 = vld [vmem:[#allocation10 + $0x2a8] sm:$0xf]
    %v2168 = vld [vmem:[#allocation10 + $0x2ac] sm:$0xff]
    %v2169 = vld [vmem:[#allocation10 + $0x2b4] sm:$0xf]
    %v2170 = vld [vmem:[#allocation10 + $0x2b8] sm:$0xff]
    %v2171 = vld [vmem:[#allocation10 + $0x2c0] sm:$0xf]
    %v2172 = vld [vmem:[#allocation10 + $0x2c4] sm:$0xff]
    %v2173 = vld [vmem:[#allocation10 + $0x2cc] sm:$0xf]
    %v2174 = vld [vmem:[#allocation10 + $0x2d0] sm:$0xff]
    %v2175 = vld [vmem:[#allocation10 + $0x2d8] sm:$0xf]
    %v2176 = vld [vmem:[#allocation10 + $0x2dc] sm:$0xff]
    %v2177 = vld [vmem:[#allocation10 + $0x2e4] sm:$0xf]
    %v2178 = vld [vmem:[#allocation10 + $0x2e8] sm:$0xff]
    %v2179 = vld [vmem:[#allocation10 + $0x2f0] sm:$0xf]
    %v2180 = vld [vmem:[#allocation10 + $0x2f4] sm:$0xff]
    %v2181 = vld [vmem:[#allocation10 + $0x2fc] sm:$0xf]
    %v2310 = vunpack.c.l.b16 %v2054
    %v2311 = vunpack.c.h.b16 %v2054
    %v2312 = vunpack.c.l.b16 %v2055
    %v2313 = vunpack.c.l.b16 %v2056
    %v2314 = vunpack.c.h.b16 %v2056
    %v2315 = vunpack.c.l.b16 %v2057
    %v2316 = vunpack.c.l.b16 %v2058
    %v2317 = vunpack.c.h.b16 %v2058
    %v2318 = vunpack.c.l.b16 %v2059
    %v2319 = vunpack.c.l.b16 %v2060
    %v2320 = vunpack.c.h.b16 %v2060
    %v2321 = vunpack.c.l.b16 %v2061
    %v2322 = vunpack.c.l.b16 %v2062
    %v2323 = vunpack.c.h.b16 %v2062
    %v2324 = vunpack.c.l.b16 %v2063
    %v2325 = vunpack.c.l.b16 %v2064
    %v2326 = vunpack.c.h.b16 %v2064
    %v2327 = vunpack.c.l.b16 %v2065
    %v2328 = vunpack.c.l.b16 %v2066
    %v2329 = vunpack.c.h.b16 %v2066
    %v2330 = vunpack.c.l.b16 %v2067
    %v2331 = vunpack.c.l.b16 %v2068
    %v2332 = vunpack.c.h.b16 %v2068
    %v2333 = vunpack.c.l.b16 %v2069
    %v2334 = vunpack.c.l.b16 %v2070
    %v2335 = vunpack.c.h.b16 %v2070
    %v2336 = vunpack.c.l.b16 %v2071
    %v2337 = vunpack.c.l.b16 %v2072
    %v2338 = vunpack.c.h.b16 %v2072
    %v2339 = vunpack.c.l.b16 %v2073
    %v2340 = vunpack.c.l.b16 %v2074
    %v2341 = vunpack.c.h.b16 %v2074
    %v2342 = vunpack.c.l.b16 %v2075
    %v2343 = vunpack.c.l.b16 %v2076
    %v2344 = vunpack.c.h.b16 %v2076
    %v2345 = vunpack.c.l.b16 %v2077
    %v2346 = vunpack.c.l.b16 %v2078
    %v2347 = vunpack.c.h.b16 %v2078
    %v2348 = vunpack.c.l.b16 %v2079
    %v2349 = vunpack.c.l.b16 %v2080
    %v2350 = vunpack.c.h.b16 %v2080
    %v2351 = vunpack.c.l.b16 %v2081
    %v2352 = vunpack.c.l.b16 %v2082
    %v2353 = vunpack.c.h.b16 %v2082
    %v2354 = vunpack.c.l.b16 %v2083
    %v2355 = vunpack.c.l.b16 %v2084
    %v2356 = vunpack.c.h.b16 %v2084
    %v2357 = vunpack.c.l.b16 %v2085
    %v2358 = vunpack.c.l.b16 %v2086
    %v2359 = vunpack.c.h.b16 %v2086
    %v2360 = vunpack.c.l.b16 %v2087
    %v2361 = vunpack.c.l.b16 %v2088
    %v2362 = vunpack.c.h.b16 %v2088
    %v2363 = vunpack.c.l.b16 %v2089
    %v2364 = vunpack.c.l.b16 %v2090
    %v2365 = vunpack.c.h.b16 %v2090
    %v2366 = vunpack.c.l.b16 %v2091
    %v2367 = vunpack.c.l.b16 %v2092
    %v2368 = vunpack.c.h.b16 %v2092
    %v2369 = vunpack.c.l.b16 %v2093
    %v2370 = vunpack.c.l.b16 %v2094
    %v2371 = vunpack.c.h.b16 %v2094
    %v2372 = vunpack.c.l.b16 %v2095
    %v2373 = vunpack.c.l.b16 %v2096
    %v2374 = vunpack.c.h.b16 %v2096
    %v2375 = vunpack.c.l.b16 %v2097
    %v2376 = vunpack.c.l.b16 %v2098
    %v2377 = vunpack.c.h.b16 %v2098
    %v2378 = vunpack.c.l.b16 %v2099
    %v2379 = vunpack.c.l.b16 %v2100
    %v2380 = vunpack.c.h.b16 %v2100
    %v2381 = vunpack.c.l.b16 %v2101
    %v2382 = vunpack.c.l.b16 %v2102
    %v2383 = vunpack.c.h.b16 %v2102
    %v2384 = vunpack.c.l.b16 %v2103
    %v2385 = vunpack.c.l.b16 %v2104
    %v2386 = vunpack.c.h.b16 %v2104
    %v2387 = vunpack.c.l.b16 %v2105
    %v2388 = vunpack.c.l.b16 %v2106
    %v2389 = vunpack.c.h.b16 %v2106
    %v2390 = vunpack.c.l.b16 %v2107
    %v2391 = vunpack.c.l.b16 %v2108
    %v2392 = vunpack.c.h.b16 %v2108
    %v2393 = vunpack.c.l.b16 %v2109
    %v2394 = vunpack.c.l.b16 %v2110
    %v2395 = vunpack.c.h.b16 %v2110
    %v2396 = vunpack.c.l.b16 %v2111
    %v2397 = vunpack.c.l.b16 %v2112
    %v2398 = vunpack.c.h.b16 %v2112
    %v2399 = vunpack.c.l.b16 %v2113
    %v2400 = vunpack.c.l.b16 %v2114
    %v2401 = vunpack.c.h.b16 %v2114
    %v2402 = vunpack.c.l.b16 %v2115
    %v2403 = vunpack.c.l.b16 %v2116
    %v2404 = vunpack.c.h.b16 %v2116
    %v2405 = vunpack.c.l.b16 %v2117
    %v2406 = vunpack.c.l.b16 %v2118
    %v2407 = vunpack.c.h.b16 %v2118
    %v2408 = vunpack.c.l.b16 %v2119
    %v2409 = vunpack.c.l.b16 %v2120
    %v2410 = vunpack.c.h.b16 %v2120
    %v2411 = vunpack.c.l.b16 %v2121
    %v2412 = vunpack.c.l.b16 %v2122
    %v2413 = vunpack.c.h.b16 %v2122
    %v2414 = vunpack.c.l.b16 %v2123
    %v2415 = vunpack.c.l.b16 %v2124
    %v2416 = vunpack.c.h.b16 %v2124
    %v2417 = vunpack.c.l.b16 %v2125
    %v2418 = vunpack.c.l.b16 %v2126
    %v2419 = vunpack.c.h.b16 %v2126
    %v2420 = vunpack.c.l.b16 %v2127
    %v2421 = vunpack.c.l.b16 %v2128
    %v2422 = vunpack.c.h.b16 %v2128
    %v2423 = vunpack.c.l.b16 %v2129
    %v2424 = vunpack.c.l.b16 %v2130
    %v2425 = vunpack.c.h.b16 %v2130
    %v2426 = vunpack.c.l.b16 %v2131
    %v2427 = vunpack.c.l.b16 %v2132
    %v2428 = vunpack.c.h.b16 %v2132
    %v2429 = vunpack.c.l.b16 %v2133
    %v2430 = vunpack.c.l.b16 %v2134
    %v2431 = vunpack.c.h.b16 %v2134
    %v2432 = vunpack.c.l.b16 %v2135
    %v2433 = vunpack.c.l.b16 %v2136
    %v2434 = vunpack.c.h.b16 %v2136
    %v2435 = vunpack.c.l.b16 %v2137
    %v2436 = vunpack.c.l.b16 %v2138
    %v2437 = vunpack.c.h.b16 %v2138
    %v2438 = vunpack.c.l.b16 %v2139
    %v2439 = vunpack.c.l.b16 %v2140
    %v2440 = vunpack.c.h.b16 %v2140
    %v2441 = vunpack.c.l.b16 %v2141
    %v2442 = vunpack.c.l.b16 %v2142
    %v2443 = vunpack.c.h.b16 %v2142
    %v2444 = vunpack.c.l.b16 %v2143
    %v2445 = vunpack.c.l.b16 %v2144
    %v2446 = vunpack.c.h.b16 %v2144
    %v2447 = vunpack.c.l.b16 %v2145
    %v2448 = vunpack.c.l.b16 %v2146
    %v2449 = vunpack.c.h.b16 %v2146
    %v2450 = vunpack.c.l.b16 %v2147
    %v2451 = vunpack.c.l.b16 %v2148
    %v2452 = vunpack.c.h.b16 %v2148
    %v2453 = vunpack.c.l.b16 %v2149
    %v2454 = vunpack.c.l.b16 %v2150
    %v2455 = vunpack.c.h.b16 %v2150
    %v2456 = vunpack.c.l.b16 %v2151
    %v2457 = vunpack.c.l.b16 %v2152
    %v2458 = vunpack.c.h.b16 %v2152
    %v2459 = vunpack.c.l.b16 %v2153
    %v2460 = vunpack.c.l.b16 %v2154
    %v2461 = vunpack.c.h.b16 %v2154
    %v2462 = vunpack.c.l.b16 %v2155
    %v2463 = vunpack.c.l.b16 %v2156
    %v2464 = vunpack.c.h.b16 %v2156
    %v2465 = vunpack.c.l.b16 %v2157
    %v2466 = vunpack.c.l.b16 %v2158
    %v2467 = vunpack.c.h.b16 %v2158
    %v2468 = vunpack.c.l.b16 %v2159
    %v2469 = vunpack.c.l.b16 %v2160
    %v2470 = vunpack.c.h.b16 %v2160
    %v2471 = vunpack.c.l.b16 %v2161
    %v2472 = vunpack.c.l.b16 %v2162
    %v2473 = vunpack.c.h.b16 %v2162
    %v2474 = vunpack.c.l.b16 %v2163
    %v2475 = vunpack.c.l.b16 %v2164
    %v2476 = vunpack.c.h.b16 %v2164
    %v2477 = vunpack.c.l.b16 %v2165
    %v2478 = vunpack.c.l.b16 %v2166
    %v2479 = vunpack.c.h.b16 %v2166
    %v2480 = vunpack.c.l.b16 %v2167
    %v2481 = vunpack.c.l.b16 %v2168
    %v2482 = vunpack.c.h.b16 %v2168
    %v2483 = vunpack.c.l.b16 %v2169
    %v2484 = vunpack.c.l.b16 %v2170
    %v2485 = vunpack.c.h.b16 %v2170
    %v2486 = vunpack.c.l.b16 %v2171
    %v2487 = vunpack.c.l.b16 %v2172
    %v2488 = vunpack.c.h.b16 %v2172
    %v2489 = vunpack.c.l.b16 %v2173
    %v2490 = vunpack.c.l.b16 %v2174
    %v2491 = vunpack.c.h.b16 %v2174
    %v2492 = vunpack.c.l.b16 %v2175
    %v2493 = vunpack.c.l.b16 %v2176
    %v2494 = vunpack.c.h.b16 %v2176
    %v2495 = vunpack.c.l.b16 %v2177
    %v2496 = vunpack.c.l.b16 %v2178
    %v2497 = vunpack.c.h.b16 %v2178
    %v2498 = vunpack.c.l.b16 %v2179
    %v2499 = vunpack.c.l.b16 %v2180
    %v2500 = vunpack.c.h.b16 %v2180
    %v2501 = vunpack.c.l.b16 %v2181
    %v2502 = vpack.c.b16 %v2313, %v2310
    %v2503 = vpack.c.b16 %v2314, %v2311
    %v2504 = vpack.c.b16 %v2315, %v2312
    %v2505 = vpack.c.b16 %v2319, %v2316
    %v2506 = vpack.c.b16 %v2320, %v2317
    %v2507 = vpack.c.b16 %v2321, %v2318
    %v2508 = vpack.c.b16 %v2325, %v2322
    %v2509 = vpack.c.b16 %v2326, %v2323
    %v2510 = vpack.c.b16 %v2327, %v2324
    %v2511 = vpack.c.b16 %v2331, %v2328
    %v2512 = vpack.c.b16 %v2332, %v2329
    %v2513 = vpack.c.b16 %v2333, %v2330
    %v2514 = vpack.c.b16 %v2337, %v2334
    %v2515 = vpack.c.b16 %v2338, %v2335
    %v2516 = vpack.c.b16 %v2339, %v2336
    %v2517 = vpack.c.b16 %v2343, %v2340
    %v2518 = vpack.c.b16 %v2344, %v2341
    %v2519 = vpack.c.b16 %v2345, %v2342
    %v2520 = vpack.c.b16 %v2349, %v2346
    %v2521 = vpack.c.b16 %v2350, %v2347
    %v2522 = vpack.c.b16 %v2351, %v2348
    %v2523 = vpack.c.b16 %v2355, %v2352
    %v2524 = vpack.c.b16 %v2356, %v2353
    %v2525 = vpack.c.b16 %v2357, %v2354
    %v2526 = vpack.c.b16 %v2361, %v2358
    %v2527 = vpack.c.b16 %v2362, %v2359
    %v2528 = vpack.c.b16 %v2363, %v2360
    %v2529 = vpack.c.b16 %v2367, %v2364
    %v2530 = vpack.c.b16 %v2368, %v2365
    %v2531 = vpack.c.b16 %v2369, %v2366
    %v2532 = vpack.c.b16 %v2373, %v2370
    %v2533 = vpack.c.b16 %v2374, %v2371
    %v2534 = vpack.c.b16 %v2375, %v2372
    %v2535 = vpack.c.b16 %v2379, %v2376
    %v2536 = vpack.c.b16 %v2380, %v2377
    %v2537 = vpack.c.b16 %v2381, %v2378
    %v2538 = vpack.c.b16 %v2385, %v2382
    %v2539 = vpack.c.b16 %v2386, %v2383
    %v2540 = vpack.c.b16 %v2387, %v2384
    %v2541 = vpack.c.b16 %v2391, %v2388
    %v2542 = vpack.c.b16 %v2392, %v2389
    %v2543 = vpack.c.b16 %v2393, %v2390
    %v2544 = vpack.c.b16 %v2397, %v2394
    %v2545 = vpack.c.b16 %v2398, %v2395
    %v2546 = vpack.c.b16 %v2399, %v2396
    %v2547 = vpack.c.b16 %v2403, %v2400
    %v2548 = vpack.c.b16 %v2404, %v2401
    %v2549 = vpack.c.b16 %v2405, %v2402
    %v2550 = vpack.c.b16 %v2409, %v2406
    %v2551 = vpack.c.b16 %v2410, %v2407
    %v2552 = vpack.c.b16 %v2411, %v2408
    %v2553 = vpack.c.b16 %v2415, %v2412
    %v2554 = vpack.c.b16 %v2416, %v2413
    %v2555 = vpack.c.b16 %v2417, %v2414
    %v2556 = vpack.c.b16 %v2421, %v2418
    %v2557 = vpack.c.b16 %v2422, %v2419
    %v2558 = vpack.c.b16 %v2423, %v2420
    %v2559 = vpack.c.b16 %v2427, %v2424
    %v2560 = vpack.c.b16 %v2428, %v2425
    %v2561 = vpack.c.b16 %v2429, %v2426
    %v2562 = vpack.c.b16 %v2433, %v2430
    %v2563 = vpack.c.b16 %v2434, %v2431
    %v2564 = vpack.c.b16 %v2435, %v2432
    %v2565 = vpack.c.b16 %v2439, %v2436
    %v2566 = vpack.c.b16 %v2440, %v2437
    %v2567 = vpack.c.b16 %v2441, %v2438
    %v2568 = vpack.c.b16 %v2445, %v2442
    %v2569 = vpack.c.b16 %v2446, %v2443
    %v2570 = vpack.c.b16 %v2447, %v2444
    %v2571 = vpack.c.b16 %v2451, %v2448
    %v2572 = vpack.c.b16 %v2452, %v2449
    %v2573 = vpack.c.b16 %v2453, %v2450
    %v2574 = vpack.c.b16 %v2457, %v2454
    %v2575 = vpack.c.b16 %v2458, %v2455
    %v2576 = vpack.c.b16 %v2459, %v2456
    %v2577 = vpack.c.b16 %v2463, %v2460
    %v2578 = vpack.c.b16 %v2464, %v2461
    %v2579 = vpack.c.b16 %v2465, %v2462
    %v2580 = vpack.c.b16 %v2469, %v2466
    %v2581 = vpack.c.b16 %v2470, %v2467
    %v2582 = vpack.c.b16 %v2471, %v2468
    %v2583 = vpack.c.b16 %v2475, %v2472
    %v2584 = vpack.c.b16 %v2476, %v2473
    %v2585 = vpack.c.b16 %v2477, %v2474
    %v2586 = vpack.c.b16 %v2481, %v2478
    %v2587 = vpack.c.b16 %v2482, %v2479
    %v2588 = vpack.c.b16 %v2483, %v2480
    %v2589 = vpack.c.b16 %v2487, %v2484
    %v2590 = vpack.c.b16 %v2488, %v2485
    %v2591 = vpack.c.b16 %v2489, %v2486
    %v2592 = vpack.c.b16 %v2493, %v2490
    %v2593 = vpack.c.b16 %v2494, %v2491
    %v2594 = vpack.c.b16 %v2495, %v2492
    %v2595 = vpack.c.b16 %v2499, %v2496
    %v2596 = vpack.c.b16 %v2500, %v2497
    %v2597 = vpack.c.b16 %v2501, %v2498
    %2694 = vmatprep.subr.bf16.mxu0 %v2524
    %2695 = vmatpush1.bf16.msra.mxu0 %v2523
    %2696 = vmatprep.subr.bf16.mxu0 %v2521
    %2697 = vmatpush1.bf16.msra.mxu0 %v2520
    %2698 = vmatprep.subr.bf16.mxu0 %v2518
    %2699 = vmatpush1.bf16.msra.mxu0 %v2517
    %2700 = vmatprep.subr.bf16.mxu0 %v2515
    %2701 = vmatpush1.bf16.msra.mxu0 %v2514
    %2702 = vmatprep.subr.bf16.mxu0 %v2512
    %2703 = vmatpush1.bf16.msra.mxu0 %v2511
    %2704 = vmatprep.subr.bf16.mxu0 %v2509
    %2705 = vmatpush1.bf16.msra.mxu0 %v2508
    %2706 = vmatprep.subr.bf16.mxu0 %v2506
    %2707 = vmatpush1.bf16.msra.mxu0 %v2505
    %2708 = vmatprep.subr.bf16.mxu0 %v2503
    %2709 = vmatpush1.bf16.msra.mxu0 %v2502
    %2710 = vmatprep.subr.bf16.mxu0 %v2548
    %2711 = vmatpush2.bf16.msra.mxu0 %v2547
    %2712 = vmatprep.subr.bf16.mxu0 %v2545
    %2713 = vmatpush2.bf16.msra.mxu0 %v2544
    %2714 = vmatprep.subr.bf16.mxu0 %v2542
    %2715 = vmatpush2.bf16.msra.mxu0 %v2541
    %2716 = vmatprep.subr.bf16.mxu0 %v2539
    %2717 = vmatpush2.bf16.msra.mxu0 %v2538
    %2718 = vmatprep.subr.bf16.mxu0 %v2536
    %2719 = vmatpush2.bf16.msra.mxu0 %v2535
    %2720 = vmatprep.subr.bf16.mxu0 %v2533
    %2721 = vmatpush2.bf16.msra.mxu0 %v2532
    %2722 = vmatprep.subr.bf16.mxu0 %v2530
    %2723 = vmatpush2.bf16.msra.mxu0 %v2529
    %2724 = vmatprep.subr.bf16.mxu0 %v2527
    %2725 = vmatpush2.bf16.msra.mxu0 %v2526
    %2726 = vmatprep.mubr.bf16.mxu0 %v2051
    %2727 = vmatmul.mubr.bf16.gmra.mxu0 %v2050
    %v2728 = vpop.f32.mrf.mxu0
    %v2729 = vadd.f32 0.0, %v2728
    %v2730 = vpop.f32.mrf.mxu0
    %v2731 = vadd.f32 0.0, %v2730
    %v2732 = vpop.f32.mrf.mxu0
    %v2733 = vpop.f32.mrf.mxu0
    %2734 = vdwg.mxu0
    %2735 = vmatprep.subr.bf16.mxu0 %v2572
    %2736 = vmatpush1.bf16.msra.mxu0 %v2571
    %2737 = vmatprep.subr.bf16.mxu0 %v2569
    %2738 = vmatpush1.bf16.msra.mxu0 %v2568
    %2739 = vmatprep.subr.bf16.mxu0 %v2566
    %2740 = vmatpush1.bf16.msra.mxu0 %v2565
    %2741 = vmatprep.subr.bf16.mxu0 %v2563
    %2742 = vmatpush1.bf16.msra.mxu0 %v2562
    %2743 = vmatprep.subr.bf16.mxu0 %v2560
    %2744 = vmatpush1.bf16.msra.mxu0 %v2559
    %2745 = vmatprep.subr.bf16.mxu0 %v2557
    %2746 = vmatpush1.bf16.msra.mxu0 %v2556
    %2747 = vmatprep.subr.bf16.mxu0 %v2554
    %2748 = vmatpush1.bf16.msra.mxu0 %v2553
    %2749 = vmatprep.subr.bf16.mxu0 %v2551
    %2750 = vmatpush1.bf16.msra.mxu0 %v2550
    %2751 = vmatprep.subr.bf16.mxu0 %v2596
    %2752 = vmatpush2.bf16.msra.mxu0 %v2595
    %2753 = vmatprep.subr.bf16.mxu0 %v2593
    %2754 = vmatpush2.bf16.msra.mxu0 %v2592
    %2755 = vmatprep.subr.bf16.mxu0 %v2590
    %2756 = vmatpush2.bf16.msra.mxu0 %v2589
    %2757 = vmatprep.subr.bf16.mxu0 %v2587
    %2758 = vmatpush2.bf16.msra.mxu0 %v2586
    %2759 = vmatprep.subr.bf16.mxu0 %v2584
    %2760 = vmatpush2.bf16.msra.mxu0 %v2583
    %2761 = vmatprep.subr.bf16.mxu0 %v2581
    %2762 = vmatpush2.bf16.msra.mxu0 %v2580
    %2763 = vmatprep.subr.bf16.mxu0 %v2578
    %2764 = vmatpush2.bf16.msra.mxu0 %v2577
    %2765 = vmatprep.subr.bf16.mxu0 %v2575
    %2766 = vmatpush2.bf16.msra.mxu0 %v2574
    %2767 = vmatprep.mubr.bf16.mxu0 %v2053
    %2768 = vmatmul.mubr.bf16.gmra.mxu0 %v2052
    %v2769 = vpop.f32.mrf.mxu0
    %v2770 = vadd.f32 %v2729, %v2769
    %v2771 = vpop.f32.mrf.mxu0
    %v2772 = vadd.f32 %v2731, %v2771
    %v2773 = vpop.f32.mrf.mxu0
    %v2774 = vpop.f32.mrf.mxu0
    %2775 = vdwg.mxu0
    %2776 = vmatprep.subr.bf16.mxu0 0
    %2777 = vmatpush1.bf16.msra.mxu0 %v2525
    %2778 = vmatprep.subr.bf16.mxu0 0
    %2779 = vmatpush1.bf16.msra.mxu0 %v2522
    %2780 = vmatprep.subr.bf16.mxu0 0
    %2781 = vmatpush1.bf16.msra.mxu0 %v2519
    %2782 = vmatprep.subr.bf16.mxu0 0
    %2783 = vmatpush1.bf16.msra.mxu0 %v2516
    %2784 = vmatprep.subr.bf16.mxu0 0
    %2785 = vmatpush1.bf16.msra.mxu0 %v2513
    %2786 = vmatprep.subr.bf16.mxu0 0
    %2787 = vmatpush1.bf16.msra.mxu0 %v2510
    %2788 = vmatprep.subr.bf16.mxu0 0
    %2789 = vmatpush1.bf16.msra.mxu0 %v2507
    %2790 = vmatprep.subr.bf16.mxu0 0
    %2791 = vmatpush1.bf16.msra.mxu0 %v2504
    %2792 = vmatprep.subr.bf16.mxu0 0
    %2793 = vmatpush2.bf16.msra.mxu0 %v2549
    %2794 = vmatprep.subr.bf16.mxu0 0
    %2795 = vmatpush2.bf16.msra.mxu0 %v2546
    %2796 = vmatprep.subr.bf16.mxu0 0
    %2797 = vmatpush2.bf16.msra.mxu0 %v2543
    %2798 = vmatprep.subr.bf16.mxu0 0
    %2799 = vmatpush2.bf16.msra.mxu0 %v2540
    %2800 = vmatprep.subr.bf16.mxu0 0
    %2801 = vmatpush2.bf16.msra.mxu0 %v2537
    %2802 = vmatprep.subr.bf16.mxu0 0
    %2803 = vmatpush2.bf16.msra.mxu0 %v2534
    %2804 = vmatprep.subr.bf16.mxu0 0
    %2805 = vmatpush2.bf16.msra.mxu0 %v2531
    %2806 = vmatprep.subr.bf16.mxu0 0
    %2807 = vmatpush2.bf16.msra.mxu0 %v2528
    %2808 = vmatprep.mubr.bf16.mxu0 %v2051
    %2809 = vmatmul.mubr.bf16.gmra.mxu0 %v2050
    %v2810 = vpop.f32.mrf.mxu0
    %v2811 = vadd.f32 0.0, %v2810
    %v2812 = vpop.f32.mrf.mxu0
    %v2813 = vpop.f32.mrf.mxu0
    %v2814 = vpop.f32.mrf.mxu0
    %2815 = vdwg.mxu0
    %2816 = vmatprep.subr.bf16.mxu0 0
    %2817 = vmatpush1.bf16.msra.mxu0 %v2573
    %2818 = vmatprep.subr.bf16.mxu0 0
    %2819 = vmatpush1.bf16.msra.mxu0 %v2570
    %2820 = vmatprep.subr.bf16.mxu0 0
    %2821 = vmatpush1.bf16.msra.mxu0 %v2567
    %2822 = vmatprep.subr.bf16.mxu0 0
    %2823 = vmatpush1.bf16.msra.mxu0 %v2564
    %2824 = vmatprep.subr.bf16.mxu0 0
    %2825 = vmatpush1.bf16.msra.mxu0 %v2561
    %2826 = vmatprep.subr.bf16.mxu0 0
    %2827 = vmatpush1.bf16.msra.mxu0 %v2558
    %2828 = vmatprep.subr.bf16.mxu0 0
    %2829 = vmatpush1.bf16.msra.mxu0 %v2555
    %2830 = vmatprep.subr.bf16.mxu0 0
    %2831 = vmatpush1.bf16.msra.mxu0 %v2552
    %2832 = vmatprep.subr.bf16.mxu0 0
    %2833 = vmatpush2.bf16.msra.mxu0 %v2597
    %2834 = vmatprep.subr.bf16.mxu0 0
    %2835 = vmatpush2.bf16.msra.mxu0 %v2594
    %2836 = vmatprep.subr.bf16.mxu0 0
    %2837 = vmatpush2.bf16.msra.mxu0 %v2591
    %2838 = vmatprep.subr.bf16.mxu0 0
    %2839 = vmatpush2.bf16.msra.mxu0 %v2588
    %2840 = vmatprep.subr.bf16.mxu0 0
    %2841 = vmatpush2.bf16.msra.mxu0 %v2585
    %2842 = vmatprep.subr.bf16.mxu0 0
    %2843 = vmatpush2.bf16.msra.mxu0 %v2582
    %2844 = vmatprep.subr.bf16.mxu0 0
    %2845 = vmatpush2.bf16.msra.mxu0 %v2579
    %2846 = vmatprep.subr.bf16.mxu0 0
    %2847 = vmatpush2.bf16.msra.mxu0 %v2576
    %2848 = vmatprep.mubr.bf16.mxu0 %v2053
    %2849 = vmatmul.mubr.bf16.gmra.mxu0 %v2052
    %v2850 = vpop.f32.mrf.mxu0
    %v2851 = vadd.f32 %v2811, %v2850
    %v2852 = vpop.f32.mrf.mxu0
    %v2853 = vpop.f32.mrf.mxu0
    %v2854 = vpop.f32.mrf.mxu0
    %2855 = vdwg.mxu0
    %v2856 = vld [vmem:[%s6] sm:$0x7]
    %v2857 = vld [vmem:[%s7] sm:$0x7]
    %2858 = vmatprep.subr.mxu0 0.0
    %2859 = vmatpush1.msra.mxu0 0.0
    %2860 = vmatprep.subr.mxu0 0.0
    %2861 = vmatpush1.msra.mxu0 0.0
    %2862 = vmatprep.subr.mxu0 0.0
    %2863 = vmatpush1.msra.mxu0 0.0
    %2864 = vmatprep.subr.mxu0 0.0
    %2865 = vmatpush1.msra.mxu0 0.0
    %2866 = vmatprep.subr.mxu0 0.0
    %2867 = vmatpush1.msra.mxu0 0.0
    %2868 = vmatprep.subr.mxu0 0.0
    %2869 = vmatpush1.msra.mxu0 0.0
    %2870 = vmatprep.subr.mxu0 0.0
    %2871 = vmatpush1.msra.mxu0 0.0
    %2872 = vmatprep.subr.mxu0 0.0
    %2873 = vmatpush1.msra.mxu0 0.0
    %2874 = vmatprep.subr.mxu0 0.0
    %2875 = vmatpush1.msra.mxu0 0.0
    %2876 = vmatprep.subr.mxu0 0.0
    %2877 = vmatpush1.msra.mxu0 0.0
    %2878 = vmatprep.subr.mxu0 0.0
    %2879 = vmatpush1.msra.mxu0 0.0
    %2880 = vmatprep.subr.mxu0 0.0
    %2881 = vmatpush1.msra.mxu0 0.0
    %2882 = vmatprep.subr.mxu0 0.0
    %2883 = vmatpush1.msra.mxu0 0.0
    %2884 = vmatprep.subr.mxu0 0.0
    %2885 = vmatpush1.msra.mxu0 0.0
    %2886 = vmatprep.subr.mxu0 0.0
    %2887 = vmatpush1.msra.mxu0 0.0
    %2888 = vmatprep.subr.mxu0 %v2772
    %2889 = vmatpush1.msra.mxu0 %v2770
    %2890 = vmatprep.subr.mxu0 0.0
    %2891 = vmatpush2.msra.mxu0 0.0
    %2892 = vmatprep.subr.mxu0 0.0
    %2893 = vmatpush2.msra.mxu0 0.0
    %2894 = vmatprep.subr.mxu0 0.0
    %2895 = vmatpush2.msra.mxu0 0.0
    %2896 = vmatprep.subr.mxu0 0.0
    %2897 = vmatpush2.msra.mxu0 0.0
    %2898 = vmatprep.subr.mxu0 0.0
    %2899 = vmatpush2.msra.mxu0 0.0
    %2900 = vmatprep.subr.mxu0 0.0
    %2901 = vmatpush2.msra.mxu0 0.0
    %2902 = vmatprep.subr.mxu0 0.0
    %2903 = vmatpush2.msra.mxu0 0.0
    %2904 = vmatprep.subr.mxu0 0.0
    %2905 = vmatpush2.msra.mxu0 0.0
    %2906 = vmatprep.subr.mxu0 0.0
    %2907 = vmatpush2.msra.mxu0 0.0
    %2908 = vmatprep.subr.mxu0 0.0
    %2909 = vmatpush2.msra.mxu0 0.0
    %2910 = vmatprep.subr.mxu0 0.0
    %2911 = vmatpush2.msra.mxu0 0.0
    %2912 = vmatprep.subr.mxu0 0.0
    %2913 = vmatpush2.msra.mxu0 0.0
    %2914 = vmatprep.subr.mxu0 0.0
    %2915 = vmatpush2.msra.mxu0 0.0
    %2916 = vmatprep.subr.mxu0 0.0
    %2917 = vmatpush2.msra.mxu0 0.0
    %2918 = vmatprep.subr.mxu0 0.0
    %2919 = vmatpush2.msra.mxu0 0.0
    %2920 = vmatprep.subr.mxu0 0.0
    %2921 = vmatpush2.msra.mxu0 0.0
    %2922 = vmatprep.mubr.f32.mxu0 0.0
    %2923 = vmatmul.mubr.f32.gmra.mxu0 %v1640
    %v2924 = vpop.f32.mrf.mxu0
    %v2925 = vadd.f32 0.0, %v2924
    %v2926 = vpop.f32.mrf.mxu0
    %v2927 = vadd.f32 0.0, %v2926
    %2928 = vdwg.mxu0
    %2929 = vmatprep.subr.mxu0 0.0
    %2930 = vmatpush1.msra.mxu0 0.0
    %2931 = vmatprep.subr.mxu0 0.0
    %2932 = vmatpush1.msra.mxu0 0.0
    %2933 = vmatprep.subr.mxu0 0.0
    %2934 = vmatpush1.msra.mxu0 0.0
    %2935 = vmatprep.subr.mxu0 0.0
    %2936 = vmatpush1.msra.mxu0 0.0
    %2937 = vmatprep.subr.mxu0 0.0
    %2938 = vmatpush1.msra.mxu0 0.0
    %2939 = vmatprep.subr.mxu0 0.0
    %2940 = vmatpush1.msra.mxu0 0.0
    %2941 = vmatprep.subr.mxu0 0.0
    %2942 = vmatpush1.msra.mxu0 0.0
    %2943 = vmatprep.subr.mxu0 0.0
    %2944 = vmatpush1.msra.mxu0 0.0
    %2945 = vmatprep.subr.mxu0 0.0
    %2946 = vmatpush1.msra.mxu0 0.0
    %2947 = vmatprep.subr.mxu0 0.0
    %2948 = vmatpush1.msra.mxu0 0.0
    %2949 = vmatprep.subr.mxu0 0.0
    %2950 = vmatpush1.msra.mxu0 0.0
    %2951 = vmatprep.subr.mxu0 0.0
    %2952 = vmatpush1.msra.mxu0 0.0
    %2953 = vmatprep.subr.mxu0 0.0
    %2954 = vmatpush1.msra.mxu0 0.0
    %2955 = vmatprep.subr.mxu0 0.0
    %2956 = vmatpush1.msra.mxu0 0.0
    %2957 = vmatprep.subr.mxu0 0.0
    %2958 = vmatpush1.msra.mxu0 0.0
    %2959 = vmatprep.subr.mxu0 0.0
    %2960 = vmatpush1.msra.mxu0 %v2851
    %2961 = vmatprep.subr.mxu0 0.0
    %2962 = vmatpush2.msra.mxu0 0.0
    %2963 = vmatprep.subr.mxu0 0.0
    %2964 = vmatpush2.msra.mxu0 0.0
    %2965 = vmatprep.subr.mxu0 0.0
    %2966 = vmatpush2.msra.mxu0 0.0
    %2967 = vmatprep.subr.mxu0 0.0
    %2968 = vmatpush2.msra.mxu0 0.0
    %2969 = vmatprep.subr.mxu0 0.0
    %2970 = vmatpush2.msra.mxu0 0.0
    %2971 = vmatprep.subr.mxu0 0.0
    %2972 = vmatpush2.msra.mxu0 0.0
    %2973 = vmatprep.subr.mxu0 0.0
    %2974 = vmatpush2.msra.mxu0 0.0
    %2975 = vmatprep.subr.mxu0 0.0
    %2976 = vmatpush2.msra.mxu0 0.0
    %2977 = vmatprep.subr.mxu0 0.0
    %2978 = vmatpush2.msra.mxu0 0.0
    %2979 = vmatprep.subr.mxu0 0.0
    %2980 = vmatpush2.msra.mxu0 0.0
    %2981 = vmatprep.subr.mxu0 0.0
    %2982 = vmatpush2.msra.mxu0 0.0
    %2983 = vmatprep.subr.mxu0 0.0
    %2984 = vmatpush2.msra.mxu0 0.0
    %2985 = vmatprep.subr.mxu0 0.0
    %2986 = vmatpush2.msra.mxu0 0.0
    %2987 = vmatprep.subr.mxu0 0.0
    %2988 = vmatpush2.msra.mxu0 0.0
    %2989 = vmatprep.subr.mxu0 0.0
    %2990 = vmatpush2.msra.mxu0 0.0
    %2991 = vmatprep.subr.mxu0 0.0
    %2992 = vmatpush2.msra.mxu0 0.0
    %2993 = vmatprep.mubr.f32.mxu0 0.0
    %2994 = vmatmul.mubr.f32.gmra.mxu0 %v1640
    %v2995 = vpop.f32.mrf.mxu0
    %v2996 = vadd.f32 0.0, %v2995
    %v2997 = vpop.f32.mrf.mxu0
    %2998 = vdwg.mxu0
    %v2999 = vmul.f32 %v2925, 0.5
    %v3000 = vmul.f32 %v2927, 0.5
    %v3001 = vmul.f32 %v2996, 0.5
    %v3002 = vlaneseq
    %v3003 = vshrl.u32 %v3002, 7
    %v3004 = vsub.s32 0, %v3003
    %v3005 = vrot.slane %v2999, %v3004
    %v3006 = vlaneseq
    %v3007 = vshrl.u32 %v3006, 7
    %v3008 = vsub.s32 0, %v3007
    %v3009 = vrot.slane %v3000, %v3008
    %v3010 = vlaneseq
    %v3011 = vshrl.u32 %v3010, 7
    %v3012 = vsub.s32 0, %v3011
    %v3013 = vrot.slane %v3001, %v3012
    %v3014 = vsub.f32 %v2770, %v3005
    %v3015 = vsub.f32 %v2772, %v3009
    %v3016 = vsub.f32 %v2851, %v3013
    %v3017 = vmul.f32 %v3014, %v3014
    %v3018 = vmul.f32 %v3015, %v3015
    %v3019 = vmul.f32 %v3016, %v3016
    %3020 = vmatprep.subr.mxu0 0.0
    %3021 = vmatpush1.msra.mxu0 0.0
    %3022 = vmatprep.subr.mxu0 0.0
    %3023 = vmatpush1.msra.mxu0 0.0
    %3024 = vmatprep.subr.mxu0 0.0
    %3025 = vmatpush1.msra.mxu0 0.0
    %3026 = vmatprep.subr.mxu0 0.0
    %3027 = vmatpush1.msra.mxu0 0.0
    %3028 = vmatprep.subr.mxu0 0.0
    %3029 = vmatpush1.msra.mxu0 0.0
    %3030 = vmatprep.subr.mxu0 0.0
    %3031 = vmatpush1.msra.mxu0 0.0
    %3032 = vmatprep.subr.mxu0 0.0
    %3033 = vmatpush1.msra.mxu0 0.0
    %3034 = vmatprep.subr.mxu0 0.0
    %3035 = vmatpush1.msra.mxu0 0.0
    %3036 = vmatprep.subr.mxu0 0.0
    %3037 = vmatpush1.msra.mxu0 0.0
    %3038 = vmatprep.subr.mxu0 0.0
    %3039 = vmatpush1.msra.mxu0 0.0
    %3040 = vmatprep.subr.mxu0 0.0
    %3041 = vmatpush1.msra.mxu0 0.0
    %3042 = vmatprep.subr.mxu0 0.0
    %3043 = vmatpush1.msra.mxu0 0.0
    %3044 = vmatprep.subr.mxu0 0.0
    %3045 = vmatpush1.msra.mxu0 0.0
    %3046 = vmatprep.subr.mxu0 0.0
    %3047 = vmatpush1.msra.mxu0 0.0
    %3048 = vmatprep.subr.mxu0 0.0
    %3049 = vmatpush1.msra.mxu0 0.0
    %3050 = vmatprep.subr.mxu0 %v3018
    %3051 = vmatpush1.msra.mxu0 %v3017
    %3052 = vmatprep.subr.mxu0 0.0
    %3053 = vmatpush2.msra.mxu0 0.0
    %3054 = vmatprep.subr.mxu0 0.0
    %3055 = vmatpush2.msra.mxu0 0.0
    %3056 = vmatprep.subr.mxu0 0.0
    %3057 = vmatpush2.msra.mxu0 0.0
    %3058 = vmatprep.subr.mxu0 0.0
    %3059 = vmatpush2.msra.mxu0 0.0
    %3060 = vmatprep.subr.mxu0 0.0
    %3061 = vmatpush2.msra.mxu0 0.0
    %3062 = vmatprep.subr.mxu0 0.0
    %3063 = vmatpush2.msra.mxu0 0.0
    %3064 = vmatprep.subr.mxu0 0.0
    %3065 = vmatpush2.msra.mxu0 0.0
    %3066 = vmatprep.subr.mxu0 0.0
    %3067 = vmatpush2.msra.mxu0 0.0
    %3068 = vmatprep.subr.mxu0 0.0
    %3069 = vmatpush2.msra.mxu0 0.0
    %3070 = vmatprep.subr.mxu0 0.0
    %3071 = vmatpush2.msra.mxu0 0.0
    %3072 = vmatprep.subr.mxu0 0.0
    %3073 = vmatpush2.msra.mxu0 0.0
    %3074 = vmatprep.subr.mxu0 0.0
    %3075 = vmatpush2.msra.mxu0 0.0
    %3076 = vmatprep.subr.mxu0 0.0
    %3077 = vmatpush2.msra.mxu0 0.0
    %3078 = vmatprep.subr.mxu0 0.0
    %3079 = vmatpush2.msra.mxu0 0.0
    %3080 = vmatprep.subr.mxu0 0.0
    %3081 = vmatpush2.msra.mxu0 0.0
    %3082 = vmatprep.subr.mxu0 0.0
    %3083 = vmatpush2.msra.mxu0 0.0
    %3084 = vmatprep.mubr.f32.mxu0 0.0
    %3085 = vmatmul.mubr.f32.gmra.mxu0 %v1640
    %v3086 = vpop.f32.mrf.mxu0
    %v3087 = vadd.f32 0.0, %v3086
    %v3088 = vpop.f32.mrf.mxu0
    %v3089 = vadd.f32 0.0, %v3088
    %3090 = vdwg.mxu0
    %3091 = vmatprep.subr.mxu0 0.0
    %3092 = vmatpush1.msra.mxu0 0.0
    %3093 = vmatprep.subr.mxu0 0.0
    %3094 = vmatpush1.msra.mxu0 0.0
    %3095 = vmatprep.subr.mxu0 0.0
    %3096 = vmatpush1.msra.mxu0 0.0
    %3097 = vmatprep.subr.mxu0 0.0
    %3098 = vmatpush1.msra.mxu0 0.0
    %3099 = vmatprep.subr.mxu0 0.0
    %3100 = vmatpush1.msra.mxu0 0.0
    %3101 = vmatprep.subr.mxu0 0.0
    %3102 = vmatpush1.msra.mxu0 0.0
    %3103 = vmatprep.subr.mxu0 0.0
    %3104 = vmatpush1.msra.mxu0 0.0
    %3105 = vmatprep.subr.mxu0 0.0
    %3106 = vmatpush1.msra.mxu0 0.0
    %3107 = vmatprep.subr.mxu0 0.0
    %3108 = vmatpush1.msra.mxu0 0.0
    %3109 = vmatprep.subr.mxu0 0.0
    %3110 = vmatpush1.msra.mxu0 0.0
    %3111 = vmatprep.subr.mxu0 0.0
    %3112 = vmatpush1.msra.mxu0 0.0
    %3113 = vmatprep.subr.mxu0 0.0
    %3114 = vmatpush1.msra.mxu0 0.0
    %3115 = vmatprep.subr.mxu0 0.0
    %3116 = vmatpush1.msra.mxu0 0.0
    %3117 = vmatprep.subr.mxu0 0.0
    %3118 = vmatpush1.msra.mxu0 0.0
    %3119 = vmatprep.subr.mxu0 0.0
    %3120 = vmatpush1.msra.mxu0 0.0
    %3121 = vmatprep.subr.mxu0 0.0
    %3122 = vmatpush1.msra.mxu0 %v3019
    %3123 = vmatprep.subr.mxu0 0.0
    %3124 = vmatpush2.msra.mxu0 0.0
    %3125 = vmatprep.subr.mxu0 0.0
    %3126 = vmatpush2.msra.mxu0 0.0
    %3127 = vmatprep.subr.mxu0 0.0
    %3128 = vmatpush2.msra.mxu0 0.0
    %3129 = vmatprep.subr.mxu0 0.0
    %3130 = vmatpush2.msra.mxu0 0.0
    %3131 = vmatprep.subr.mxu0 0.0
    %3132 = vmatpush2.msra.mxu0 0.0
    %3133 = vmatprep.subr.mxu0 0.0
    %3134 = vmatpush2.msra.mxu0 0.0
    %3135 = vmatprep.subr.mxu0 0.0
    %3136 = vmatpush2.msra.mxu0 0.0
    %3137 = vmatprep.subr.mxu0 0.0
    %3138 = vmatpush2.msra.mxu0 0.0
    %3139 = vmatprep.subr.mxu0 0.0
    %3140 = vmatpush2.msra.mxu0 0.0
    %3141 = vmatprep.subr.mxu0 0.0
    %3142 = vmatpush2.msra.mxu0 0.0
    %3143 = vmatprep.subr.mxu0 0.0
    %3144 = vmatpush2.msra.mxu0 0.0
    %3145 = vmatprep.subr.mxu0 0.0
    %3146 = vmatpush2.msra.mxu0 0.0
    %3147 = vmatprep.subr.mxu0 0.0
    %3148 = vmatpush2.msra.mxu0 0.0
    %3149 = vmatprep.subr.mxu0 0.0
    %3150 = vmatpush2.msra.mxu0 0.0
    %3151 = vmatprep.subr.mxu0 0.0
    %3152 = vmatpush2.msra.mxu0 0.0
    %3153 = vmatprep.subr.mxu0 0.0
    %3154 = vmatpush2.msra.mxu0 0.0
    %3155 = vmatprep.mubr.f32.mxu0 0.0
    %3156 = vmatmul.mubr.f32.gmra.mxu0 %v1640
    %v3157 = vpop.f32.mrf.mxu0
    %v3158 = vadd.f32 0.0, %v3157
    %v3159 = vpop.f32.mrf.mxu0
    %3160 = vdwg.mxu0
    %v3161 = vmul.f32 %v3087, 0.5
    %v3162 = vmul.f32 %v3089, 0.5
    %v3163 = vmul.f32 %v3158, 0.5
    %v3164 = vadd.f32 %v3161, 1e-05
    %v3165 = vadd.f32 %v3162, 1e-05
    %v3166 = vadd.f32 %v3163, 1e-05
    %v3167 = vrsqrt.pop %v3164
    %v3168 = vrsqrt.pop %v3165
    %v3169 = vrsqrt.pop %v3166
    %v3173 = vcombine.low %v3167, %v3168
    %v3175 = vunpack.c.l.s4 1966171168
    %v3176 = vunpack.c.0.s8 %v3175
    %v3177 = vlaneseq
    %v3178 = vshrl.u32 %v3177, 7
    %v3179 = vsub.s32 %v3176, %v3178
    %v3180 = vrot.slane %v3173, %v3179
    %v3182 = vunpack.c.l.s4 1966171168
    %v3183 = vunpack.c.0.s8 %v3182
    %v3184 = vlaneseq
    %v3185 = vshrl.u32 %v3184, 7
    %v3186 = vsub.s32 %v3183, %v3185
    %v3187 = vrot.slane %v3169, %v3186
    %v3188 = vcombine.low %v3180, %v3187
    %v3190 = vunpack.c.l.s4 1966171168
    %v3191 = vunpack.c.0.s8 %v3190
    %v3192 = vlaneseq
    %v3193 = vshrl.u32 %v3192, 7
    %v3194 = vsub.s32 %v3191, %v3193
    %v3195 = vrot.slane %v3188, %v3194
    %v3197 = vmul.f32 %v2856, %v3195
    %v3199 = vlaneseq
    %v3200 = vshrl.u32 %v3199, 7
    %v3201 = vsub.s32 0, %v3200
    %v3202 = vrot.slane %v3197, %v3201
    %v3203 = vlaneseq
    %v3204 = vshrl.u32 %v3203, 7
    %v3205 = vsub.s32 1, %v3204
    %v3206 = vrot.slane %v3197, %v3205
    %v3207 = vlaneseq
    %v3208 = vshrl.u32 %v3207, 7
    %v3209 = vsub.s32 2, %v3208
    %v3210 = vrot.slane %v3197, %v3209
    %v3214 = vmul.f32 %v3014, %v3202
    %v3215 = vmul.f32 %v3015, %v3206
    %v3216 = vmul.f32 %v3016, %v3210
    %v3218 = vlaneseq
    %v3219 = vshrl.u32 %v3218, 7
    %v3220 = vsub.s32 0, %v3219
    %v3221 = vrot.slane %v2857, %v3220
    %v3222 = vlaneseq
    %v3223 = vshrl.u32 %v3222, 7
    %v3224 = vsub.s32 1, %v3223
    %v3225 = vrot.slane %v2857, %v3224
    %v3226 = vlaneseq
    %v3227 = vshrl.u32 %v3226, 7
    %v3228 = vsub.s32 2, %v3227
    %v3229 = vrot.slane %v2857, %v3228
    %v3233 = vadd.f32 %v3214, %v3221
    %v3234 = vadd.f32 %v3215, %v3225
    %v3235 = vadd.f32 %v3216, %v3229
    %v3236 = vmax.f32 %v3233, 0.0
    %v3237 = vmax.f32 %v3234, 0.0
    %v3238 = vmax.f32 %v3235, 0.0
    %v3239 = vpack.c.bf16 %v3236, %v3236
    %v3240 = vpack.c.bf16 %v3237, %v3237
    %v3241 = vpack.c.bf16 %v3238, %v3238
    %v3242 = vld [vmem:[#allocation11] sm:$0xf]
    %v3243 = vld [vmem:[#allocation11 + $0x4] sm:$0xf]
    %v3244 = vld [vmem:[#allocation11 + $0x8] sm:$0xf]
    %v3245 = vld [vmem:[#allocation11 + $0xc] sm:$0xf]
    %v3246 = vld [vmem:[#allocation11 + $0x10] sm:$0xf]
    %v3247 = vld [vmem:[#allocation11 + $0x14] sm:$0xf]
    %v3248 = vld [vmem:[#allocation11 + $0x18] sm:$0xf]
    %v3249 = vld [vmem:[#allocation11 + $0x1c] sm:$0xf]
    %v3250 = vld [vmem:[#allocation11 + $0x20] sm:$0xf]
    %v3251 = vld [vmem:[#allocation11 + $0x24] sm:$0xf]
    %v3252 = vld [vmem:[#allocation11 + $0x28] sm:$0xf]
    %v3253 = vld [vmem:[#allocation11 + $0x2c] sm:$0xf]
    %v3254 = vld [vmem:[#allocation11 + $0x30] sm:$0xf]
    %v3255 = vld [vmem:[#allocation11 + $0x34] sm:$0xf]
    %v3256 = vld [vmem:[#allocation11 + $0x38] sm:$0xf]
    %v3257 = vld [vmem:[#allocation11 + $0x3c] sm:$0xf]
    %v3258 = vld [vmem:[#allocation11 + $0x40] sm:$0xf]
    %v3259 = vld [vmem:[#allocation11 + $0x44] sm:$0xf]
    %v3260 = vld [vmem:[#allocation11 + $0x48] sm:$0xf]
    %v3261 = vld [vmem:[#allocation11 + $0x4c] sm:$0xf]
    %v3262 = vld [vmem:[#allocation11 + $0x50] sm:$0xf]
    %v3263 = vld [vmem:[#allocation11 + $0x54] sm:$0xf]
    %v3264 = vld [vmem:[#allocation11 + $0x58] sm:$0xf]
    %v3265 = vld [vmem:[#allocation11 + $0x5c] sm:$0xf]
    %v3266 = vld [vmem:[#allocation11 + $0x60] sm:$0xf]
    %v3267 = vld [vmem:[#allocation11 + $0x64] sm:$0xf]
    %v3268 = vld [vmem:[#allocation11 + $0x68] sm:$0xf]
    %v3269 = vld [vmem:[#allocation11 + $0x6c] sm:$0xf]
    %v3270 = vld [vmem:[#allocation11 + $0x70] sm:$0xf]
    %v3271 = vld [vmem:[#allocation11 + $0x74] sm:$0xf]
    %v3272 = vld [vmem:[#allocation11 + $0x78] sm:$0xf]
    %v3273 = vld [vmem:[#allocation11 + $0x7c] sm:$0xf]
    %v3274 = vld [vmem:[#allocation11 + $0x80] sm:$0xf]
    %v3275 = vld [vmem:[#allocation11 + $0x84] sm:$0xf]
    %v3276 = vld [vmem:[#allocation11 + $0x88] sm:$0xf]
    %v3277 = vld [vmem:[#allocation11 + $0x8c] sm:$0xf]
    %v3278 = vld [vmem:[#allocation11 + $0x90] sm:$0xf]
    %v3279 = vld [vmem:[#allocation11 + $0x94] sm:$0xf]
    %v3280 = vld [vmem:[#allocation11 + $0x98] sm:$0xf]
    %v3281 = vld [vmem:[#allocation11 + $0x9c] sm:$0xf]
    %v3282 = vld [vmem:[#allocation11 + $0xa0] sm:$0xf]
    %v3283 = vld [vmem:[#allocation11 + $0xa4] sm:$0xf]
    %v3284 = vld [vmem:[#allocation11 + $0xa8] sm:$0xf]
    %v3285 = vld [vmem:[#allocation11 + $0xac] sm:$0xf]
    %v3286 = vld [vmem:[#allocation11 + $0xb0] sm:$0xf]
    %v3287 = vld [vmem:[#allocation11 + $0xb4] sm:$0xf]
    %v3288 = vld [vmem:[#allocation11 + $0xb8] sm:$0xf]
    %v3289 = vld [vmem:[#allocation11 + $0xbc] sm:$0xf]
    %v3290 = vld [vmem:[%s9] sm:$0x1]
    %v3292 = vlaneseq
    %v3293 = vshrl.u32 %v3292, 7
    %v3294 = vsub.s32 0, %v3293
    %v3295 = vrot.slane %v3290, %v3294
    %v3345 = vunpack.c.l.b16 %v3242
    %v3346 = vunpack.c.l.b16 %v3243
    %v3347 = vunpack.c.l.b16 %v3244
    %v3348 = vunpack.c.l.b16 %v3245
    %v3349 = vunpack.c.l.b16 %v3246
    %v3350 = vunpack.c.l.b16 %v3247
    %v3351 = vunpack.c.l.b16 %v3248
    %v3352 = vunpack.c.l.b16 %v3249
    %v3353 = vunpack.c.l.b16 %v3250
    %v3354 = vunpack.c.l.b16 %v3251
    %v3355 = vunpack.c.l.b16 %v3252
    %v3356 = vunpack.c.l.b16 %v3253
    %v3357 = vunpack.c.l.b16 %v3254
    %v3358 = vunpack.c.l.b16 %v3255
    %v3359 = vunpack.c.l.b16 %v3256
    %v3360 = vunpack.c.l.b16 %v3257
    %v3361 = vunpack.c.l.b16 %v3258
    %v3362 = vunpack.c.l.b16 %v3259
    %v3363 = vunpack.c.l.b16 %v3260
    %v3364 = vunpack.c.l.b16 %v3261
    %v3365 = vunpack.c.l.b16 %v3262
    %v3366 = vunpack.c.l.b16 %v3263
    %v3367 = vunpack.c.l.b16 %v3264
    %v3368 = vunpack.c.l.b16 %v3265
    %v3369 = vunpack.c.l.b16 %v3266
    %v3370 = vunpack.c.l.b16 %v3267
    %v3371 = vunpack.c.l.b16 %v3268
    %v3372 = vunpack.c.l.b16 %v3269
    %v3373 = vunpack.c.l.b16 %v3270
    %v3374 = vunpack.c.l.b16 %v3271
    %v3375 = vunpack.c.l.b16 %v3272
    %v3376 = vunpack.c.l.b16 %v3273
    %v3377 = vunpack.c.l.b16 %v3274
    %v3378 = vunpack.c.l.b16 %v3275
    %v3379 = vunpack.c.l.b16 %v3276
    %v3380 = vunpack.c.l.b16 %v3277
    %v3381 = vunpack.c.l.b16 %v3278
    %v3382 = vunpack.c.l.b16 %v3279
    %v3383 = vunpack.c.l.b16 %v3280
    %v3384 = vunpack.c.l.b16 %v3281
    %v3385 = vunpack.c.l.b16 %v3282
    %v3386 = vunpack.c.l.b16 %v3283
    %v3387 = vunpack.c.l.b16 %v3284
    %v3388 = vunpack.c.l.b16 %v3285
    %v3389 = vunpack.c.l.b16 %v3286
    %v3390 = vunpack.c.l.b16 %v3287
    %v3391 = vunpack.c.l.b16 %v3288
    %v3392 = vunpack.c.l.b16 %v3289
    %v3393 = vpack.c.b16 %v3346, %v3345
    %v3394 = vpack.c.b16 %v3348, %v3347
    %v3395 = vpack.c.b16 %v3350, %v3349
    %v3396 = vpack.c.b16 %v3352, %v3351
    %v3397 = vpack.c.b16 %v3354, %v3353
    %v3398 = vpack.c.b16 %v3356, %v3355
    %v3399 = vpack.c.b16 %v3358, %v3357
    %v3400 = vpack.c.b16 %v3360, %v3359
    %v3401 = vpack.c.b16 %v3362, %v3361
    %v3402 = vpack.c.b16 %v3364, %v3363
    %v3403 = vpack.c.b16 %v3366, %v3365
    %v3404 = vpack.c.b16 %v3368, %v3367
    %v3405 = vpack.c.b16 %v3370, %v3369
    %v3406 = vpack.c.b16 %v3372, %v3371
    %v3407 = vpack.c.b16 %v3374, %v3373
    %v3408 = vpack.c.b16 %v3376, %v3375
    %v3409 = vpack.c.b16 %v3378, %v3377
    %v3410 = vpack.c.b16 %v3380, %v3379
    %v3411 = vpack.c.b16 %v3382, %v3381
    %v3412 = vpack.c.b16 %v3384, %v3383
    %v3413 = vpack.c.b16 %v3386, %v3385
    %v3414 = vpack.c.b16 %v3388, %v3387
    %v3415 = vpack.c.b16 %v3390, %v3389
    %v3416 = vpack.c.b16 %v3392, %v3391
    %3441 = vmatprep.subr.bf16.mxu0 0
    %3442 = vmatpush1.bf16.msra.mxu0 %v3400
    %3443 = vmatprep.subr.bf16.mxu0 0
    %3444 = vmatpush1.bf16.msra.mxu0 %v3399
    %3445 = vmatprep.subr.bf16.mxu0 0
    %3446 = vmatpush1.bf16.msra.mxu0 %v3398
    %3447 = vmatprep.subr.bf16.mxu0 0
    %3448 = vmatpush1.bf16.msra.mxu0 %v3397
    %3449 = vmatprep.subr.bf16.mxu0 0
    %3450 = vmatpush1.bf16.msra.mxu0 %v3396
    %3451 = vmatprep.subr.bf16.mxu0 0
    %3452 = vmatpush1.bf16.msra.mxu0 %v3395
    %3453 = vmatprep.subr.bf16.mxu0 0
    %3454 = vmatpush1.bf16.msra.mxu0 %v3394
    %3455 = vmatprep.subr.bf16.mxu0 0
    %3456 = vmatpush1.bf16.msra.mxu0 %v3393
    %3457 = vmatprep.subr.bf16.mxu0 0
    %3458 = vmatpush2.bf16.msra.mxu0 %v3408
    %3459 = vmatprep.subr.bf16.mxu0 0
    %3460 = vmatpush2.bf16.msra.mxu0 %v3407
    %3461 = vmatprep.subr.bf16.mxu0 0
    %3462 = vmatpush2.bf16.msra.mxu0 %v3406
    %3463 = vmatprep.subr.bf16.mxu0 0
    %3464 = vmatpush2.bf16.msra.mxu0 %v3405
    %3465 = vmatprep.subr.bf16.mxu0 0
    %3466 = vmatpush2.bf16.msra.mxu0 %v3404
    %3467 = vmatprep.subr.bf16.mxu0 0
    %3468 = vmatpush2.bf16.msra.mxu0 %v3403
    %3469 = vmatprep.subr.bf16.mxu0 0
    %3470 = vmatpush2.bf16.msra.mxu0 %v3402
    %3471 = vmatprep.subr.bf16.mxu0 0
    %3472 = vmatpush2.bf16.msra.mxu0 %v3401
    %3473 = vmatprep.mubr.bf16.mxu0 %v3240
    %3474 = vmatmul.mubr.bf16.gmra.mxu0 %v3239
    %v3475 = vpop.f32.mrf.mxu0
    %v3476 = vadd.f32 %v3295, %v3475
    %v3477 = vpop.f32.mrf.mxu0
    %v3478 = vpop.f32.mrf.mxu0
    %v3479 = vpop.f32.mrf.mxu0
    %3480 = vdwg.mxu0
    %3481 = vmatprep.subr.bf16.mxu0 0
    %3482 = vmatpush1.bf16.msra.mxu0 %v3416
    %3483 = vmatprep.subr.bf16.mxu0 0
    %3484 = vmatpush1.bf16.msra.mxu0 %v3415
    %3485 = vmatprep.subr.bf16.mxu0 0
    %3486 = vmatpush1.bf16.msra.mxu0 %v3414
    %3487 = vmatprep.subr.bf16.mxu0 0
    %3488 = vmatpush1.bf16.msra.mxu0 %v3413
    %3489 = vmatprep.subr.bf16.mxu0 0
    %3490 = vmatpush1.bf16.msra.mxu0 %v3412
    %3491 = vmatprep.subr.bf16.mxu0 0
    %3492 = vmatpush1.bf16.msra.mxu0 %v3411
    %3493 = vmatprep.subr.bf16.mxu0 0
    %3494 = vmatpush1.bf16.msra.mxu0 %v3410
    %3495 = vmatprep.subr.bf16.mxu0 0
    %3496 = vmatpush1.bf16.msra.mxu0 %v3409
    %3497 = vmatprep.subr.bf16.mxu0 0
    %3498 = vmatpush2.bf16.msra.mxu0 0
    %3499 = vmatprep.subr.bf16.mxu0 0
    %3500 = vmatpush2.bf16.msra.mxu0 0
    %3501 = vmatprep.subr.bf16.mxu0 0
    %3502 = vmatpush2.bf16.msra.mxu0 0
    %3503 = vmatprep.subr.bf16.mxu0 0
    %3504 = vmatpush2.bf16.msra.mxu0 0
    %3505 = vmatprep.subr.bf16.mxu0 0
    %3506 = vmatpush2.bf16.msra.mxu0 0
    %3507 = vmatprep.subr.bf16.mxu0 0
    %3508 = vmatpush2.bf16.msra.mxu0 0
    %3509 = vmatprep.subr.bf16.mxu0 0
    %3510 = vmatpush2.bf16.msra.mxu0 0
    %3511 = vmatprep.subr.bf16.mxu0 0
    %3512 = vmatpush2.bf16.msra.mxu0 0
    %3513 = vmatprep.mubr.bf16.mxu0 0
    %3514 = vmatmul.mubr.bf16.gmra.mxu0 %v3241
    %v3515 = vpop.f32.mrf.mxu0
    %v3516 = vadd.f32 %v3476, %v3515
    %v3517 = vpop.f32.mrf.mxu0
    %v3518 = vpop.f32.mrf.mxu0
    %v3519 = vpop.f32.mrf.mxu0
    %3520 = vdwg.mxu0
    %3521 = vst [vmem:[#allocation13] sm:$0xff] %v3516
    // Predicated region
    $region66: #{tpu_custom_call.1} parent=1 // pred_check
      _
    $region67: #{tpu_custom_call.1} parent=1 // pred_check_branch
      %3523 = sbr.rel (0) target = $region69
    $region68: #{tpu_custom_call.1} parent=1 // pred_region
      %s3525 = ssub.s32 128, 128
      %3526 = vsyncadd [#allocation4], %s3525
      %s3528 = sshll.u32 [#allocation13], 4
      %s3529 = int_to_ptr.vmem [resolvable:$true] %s3528
      %3531 = dma.vmem_to_hbm [thread:$0]  %s3529, 128, %s10, [#allocation4]
    $region69: #{tpu_custom_call.1} parent=1 // pred_fallthru
      _
    // Predicated region
    $region70: #{tpu_custom_call.1} parent=1 // pred_check
      _
    $region71: #{tpu_custom_call.1} parent=1 // pred_check_branch
      %3533 = sbr.rel (0) target = $region73
    $region72: #{tpu_custom_call.1} parent=1 // pred_region
      %3534 = dma.done [#allocation4], 128
    $region73: #{tpu_custom_call.1} parent=1 // pred_fallthru
      _
    %3535 = vsyncpa [#allocation3], 1
    %3536 = vsyncpa [#allocation6], 1
    %3537 = vsyncpa [#allocation9], 1
    %3538 = vsyncpa [#allocation12], 1
    %3539 = vsyncpa [#allocation4], 1

</llo_original>
